<compile_context>
chip_gen: v7x
topology: tpu7x:2x2x1
jax: 0.10.0
libtpu: 0.0.40
codegen_flags: <defaults>
</compile_context>

<pallas_src>
import functools
import math

import jax
import jax.numpy as jnp
from jax.experimental import pallas as pl
from jax.experimental.pallas import tpu as pltpu


def _tpu_generation():
    """Best-effort TPU generation (2..7) from the device kind string."""
    try:
        kind = jax.devices()[0].device_kind.lower()
    except Exception:
        return None
    if "tpu" not in kind:
        return None
    for tag, gen in (("v7", 7), ("7x", 7), ("v6", 6), ("v5", 5),
                     ("v4", 4), ("v3", 3), ("v2", 2)):
        if tag in kind:
            return gen
    return None


def _mha_kernel(*refs, n_heads, key_dim, val_dim, tb, n_query, graph_size,
                mask_mode, mask_rows, mxu_dtype):
    if mask_mode != "none":
        q_ref, h_ref, mask_ref, wq_ref, wk_ref, wv_ref, wo_ref, out_ref = refs
    else:
        q_ref, h_ref, wq_ref, wk_ref, wv_ref, wo_ref, out_ref = refs

    f32 = jnp.float32
    md = mxu_dtype

    qf = q_ref[...]                       # (TB*Nq, D)  in mxu dtype
    hf = h_ref[...]                       # (TB*G,  D)

    # Head-fused projections (norm_factor pre-folded into W_query on host).
    Q = jnp.dot(qf, wq_ref[...], preferred_element_type=f32)   # (TB*Nq, H*Kd)
    K = jnp.dot(hf, wk_ref[...], preferred_element_type=f32)   # (TB*G,  H*Kd)
    V = jnp.dot(hf, wv_ref[...], preferred_element_type=f32)   # (TB*G,  H*Vd)

    # Re-stack heads onto a single leading batch axis z = head*TB + b so the
    # whole attention is ONE batched QK^T + ONE softmax + ONE batched attn@V
    # (leading-batch dot_generals, no per-head loop).
    Q3 = Q.reshape(tb, n_query, n_heads * key_dim)
    K3 = K.reshape(tb, graph_size, n_heads * key_dim)
    V3 = V.reshape(tb, graph_size, n_heads * val_dim)
    Qz = jnp.concatenate(
        [Q3[:, :, hd * key_dim:(hd + 1) * key_dim] for hd in range(n_heads)], axis=0)
    Kz = jnp.concatenate(
        [K3[:, :, hd * key_dim:(hd + 1) * key_dim] for hd in range(n_heads)], axis=0)
    Vz = jnp.concatenate(
        [V3[:, :, hd * val_dim:(hd + 1) * val_dim] for hd in range(n_heads)], axis=0)
    # Qz: (H*TB, Nq, Kd), Kz: (H*TB, G, Kd), Vz: (H*TB, G, Vd)

    compat = jnp.einsum('znk,zgk->zng', Qz, Kz,
                        preferred_element_type=f32)            # (H*TB, Nq, G) f32

    if mask_mode != "none":
        m2 = mask_ref[...]                                     # (TB*Mq, G)
        if mask_mode == "bool":
            # int8 {0,1}, 1 == attention not allowed -> additive -1e9.
            madd = m2.astype(f32) * f32(-1e9)
        else:
            madd = m2.astype(f32)                              # additive (module semantics)
        madd = madd.reshape(tb, mask_rows, graph_size)
        if mask_rows != n_query:
            madd = jnp.broadcast_to(madd, (tb, n_query, graph_size))
        # Broadcast across heads ONCE (hoisted; JAX does not CSE broadcasts).
        madd = jnp.broadcast_to(madd[None], (n_heads, tb, n_query, graph_size))
        compat = compat + madd.reshape(n_heads * tb, n_query, graph_size)

    # Softmax over the graph axis -- all f32 on the VPU/EUP.
    # NOTE: fully-masked rows are not guarded (same behaviour as the module).
    m = jnp.max(compat, axis=-1, keepdims=True)
    e = jnp.exp(compat - m)
    denom = jnp.sum(e, axis=-1, keepdims=True)
    attn = e * pl.reciprocal(denom, approx=True)               # EUP approx reciprocal

    heads_z = jnp.einsum('zng,zgv->znv', attn.astype(md), Vz.astype(md),
                         preferred_element_type=f32)           # (H*TB, Nq, Vd)

    # Reassemble (TB*Nq, H*Vd) (head-major columns) and run ONE fused output
    # projection with contraction K = H*Vd instead of H tiny K=Vd matmuls.
    heads4 = heads_z.reshape(n_heads, tb, n_query, val_dim)
    heads_cat = jnp.concatenate([heads4[hd] for hd in range(n_heads)], axis=-1)
    heads_flat = heads_cat.reshape(tb * n_query, n_heads * val_dim)

    out = jnp.dot(heads_flat.astype(md), wo_ref[...],
                  preferred_element_type=f32)                  # (TB*Nq, E)
    out_ref[...] = out.astype(out_ref.dtype)


def _pick_batch_block(B, Nq, G, D, H, Kd, Vd, E, act_itemsize, gen):
    """Largest batch block that fits a conservative VMEM byte budget.

    The grid is a sequential loop on one TensorCore (v5e/v6e) with ~0.35 us of
    fixed overhead per step, so we want as FEW, as LARGE steps as possible.
    Only v7x (2 TensorCores) is allowed to split into >=2 parallel steps, and
    only when per-step compute clearly exceeds the step overhead.
    """
    itm = max(act_itemsize, 4)
    # Per-batch-element VMEM bytes: double-buffered pipelined inputs/outputs
    # plus single-buffered f32 intermediates inside the kernel body.
    pipelined = 2 * (Nq * D + G * D + Nq * G + Nq * E) * itm
    interm = 4 * (Nq * H * Kd + G * H * Kd + G * H * Vd       # Q/K/V
                  + 3 * H * Nq * G                            # compat / e / attn
                  + 2 * H * Nq * Vd + Nq * H * Vd + Nq * E)   # heads & out
    per_b = max(pipelined + interm, 1)
    budget = 24 << 20                 # well under the 32 MiB scoped default
    max_tb = max(1, budget // per_b)

    divisors = [d for d in range(1, B + 1) if B % d == 0]
    fitting = [d for d in divisors if d <= max_tb]
    tb = max(fitting) if fitting else 1

    # v7x megacore: only split if each step still dwarfs the step overhead.
    if gen == 7 and tb == B and B >= 2:
        flops_per_b = 2 * (Nq * D * H * Kd + G * D * H * (Kd + Vd)
                           + H * Nq * G * (Kd + Vd) + Nq * H * Vd * E)
        half = max((d for d in divisors if B // d >= 2), default=None)
        if half is not None and half * flops_per_b > 5_000_000:
            tb = half
    return tb


def multi_head_attention(q, h=None, W_query=None, W_key=None, W_val=None,
                         W_out=None, mask=None, batch_block=None,
                         mxu_dtype=None):
    """Pallas implementation of MultiHeadAttention.forward (eval mode)."""
    if h is None:
        h = q
    B, Nq, D = q.shape
    _, G, _ = h.shape
    H, _, Kd = W_query.shape
    Vd = W_val.shape[-1]
    E = W_out.shape[-1]
    norm_factor = 1.0 / math.sqrt(Kd)
    out_dtype = q.dtype

    gen = _tpu_generation()
    if mxu_dtype is None:
        # bf16 MXU operands pay off on v6e/v7x (bf16-native MXU, halves DMA
        # bytes); v5e / unknown chips stay f32.  Softmax math is f32 always.
        mxu_dtype = jnp.bfloat16 if gen in (6, 7) else jnp.float32
    mxu_dtype = jnp.dtype(mxu_dtype)

    # --- mask prep: un-broadcast, byte-cheap ------------------------------
    mask_mode = "none"
    mask_rows = Nq
    mask_flat = None
    if mask is not None:
        mask_arr = jnp.asarray(mask)
        if mask_arr.ndim == 2:
            mask_arr = mask_arr.reshape(B, -1, G)
        assert mask_arr.shape[0] == B and mask_arr.shape[-1] == G
        mask_rows = mask_arr.shape[1]
        assert mask_rows in (1, Nq), "mask n_query dim must be 1 or n_query"
        if mask_arr.dtype == jnp.bool_:
            mask_mode = "bool"     # True == attention not allowed
            mask_flat = mask_arr.astype(jnp.int8).reshape(B * mask_rows, G)
        else:
            mask_mode = "add"      # additive mask, added as-is (module semantics)
            mask_flat = mask_arr.astype(jnp.float32).reshape(B * mask_rows, G)

    # --- batch tiling ------------------------------------------------------
    TB = batch_block if batch_block is not None else _pick_batch_block(
        B, Nq, G, D, H, Kd, Vd, E, mxu_dtype.itemsize, gen)

    def _blocks_ok(tb):
        if tb == B:
            return True
        ok = (tb * Nq) % 8 == 0 and (tb * G) % 8 == 0
        if mask_mode == "bool":
            ok = ok and (tb * mask_rows) % 32 == 0
        elif mask_mode == "add":
            ok = ok and (tb * mask_rows) % 8 == 0
        return ok

    if not _blocks_ok(TB):
        TB = B                      # full-extent blocks are always legal
    assert B % TB == 0
    n_blocks = B // TB

    # Flat 2-D row slabs (cheap host-side reshapes); MXU operands in mxu_dtype.
    qf = q.reshape(B * Nq, D).astype(mxu_dtype)
    hf = h.reshape(B * G, D).astype(mxu_dtype)

    # Head-fused weights: norm_factor folded into W_query; W_out flattened to
    # (H*Vd, E) so the output projection is a single K = H*Vd matmul.
    wq_f = (jnp.transpose(W_query, (1, 0, 2)) * jnp.float32(norm_factor)
            ).reshape(D, H * Kd).astype(mxu_dtype)
    wk_f = jnp.transpose(W_key, (1, 0, 2)).reshape(D, H * Kd).astype(mxu_dtype)
    wv_f = jnp.transpose(W_val, (1, 0, 2)).reshape(D, H * Vd).astype(mxu_dtype)
    wo_f = W_out.reshape(-1, E).astype(mxu_dtype)

    in_specs = [
        pl.BlockSpec((TB * Nq, D), lambda i: (i, 0)),     # q rows
        pl.BlockSpec((TB * G, D), lambda i: (i, 0)),      # h rows
    ]
    args = [qf, hf]
    if mask_mode != "none":
        in_specs.append(pl.BlockSpec((TB * mask_rows, G), lambda i: (i, 0)))
        args.append(mask_flat)
    # Weights: full-extent, constant index maps -> fetched once, VMEM-resident.
    in_specs += [
        pl.BlockSpec((D, H * Kd), lambda i: (0, 0)),
        pl.BlockSpec((D, H * Kd), lambda i: (0, 0)),
        pl.BlockSpec((D, H * Vd), lambda i: (0, 0)),
        pl.BlockSpec((wo_f.shape[0], E), lambda i: (0, 0)),
    ]
    args += [wq_f, wk_f, wv_f, wo_f]

    kernel = functools.partial(
        _mha_kernel, n_heads=H, key_dim=Kd, val_dim=Vd, tb=TB, n_query=Nq,
        graph_size=G, mask_mode=mask_mode, mask_rows=mask_rows,
        mxu_dtype=mxu_dtype)

    # Advisory cost estimate so XLA can overlap surrounding ops.
    flops = 2 * (B * Nq * D * H * Kd + B * G * D * H * (Kd + Vd)
                 + H * B * Nq * G * (Kd + Vd) + B * Nq * H * Vd * E)
    bytes_accessed = (qf.size * qf.dtype.itemsize + hf.size * hf.dtype.itemsize
                      + sum(int(w.size) * w.dtype.itemsize
                            for w in (wq_f, wk_f, wv_f, wo_f))
                      + (int(mask_flat.size) * mask_flat.dtype.itemsize
                         if mask_flat is not None else 0)
                      + B * Nq * E * jnp.dtype(out_dtype).itemsize)
    cost = pl.CostEstimate(flops=int(flops), transcendentals=int(H * B * Nq * G),
                           bytes_accessed=int(bytes_accessed))

    vmem_limit = (40 << 20) if gen == 7 else (64 << 20)   # 64 MiB phys on v7x

    out_flat = pl.pallas_call(
        kernel,
        out_shape=jax.ShapeDtypeStruct((B * Nq, E), out_dtype),
        grid_spec=pltpu.PrefetchScalarGridSpec(
            num_scalar_prefetch=0,
            grid=(n_blocks,),
            in_specs=in_specs,
            out_specs=pl.BlockSpec((TB * Nq, E), lambda i: (i, 0)),
        ),
        compiler_params=pltpu.CompilerParams(
            dimension_semantics=("parallel",),
            vmem_limit_bytes=vmem_limit),
        cost_estimate=cost,
    )(*args)
    return out_flat.reshape(B, Nq, E)


def _reference(q, h, W_query, W_key, W_val, W_out, mask=None):
    """Pure-JAX reference mirroring the PyTorch forward (eval mode)."""
    norm_factor = 1.0 / math.sqrt(W_query.shape[-1])
    Q = jnp.einsum('bnd,hdk->hbnk', q, W_query)
    K = jnp.einsum('bgd,hdk->hbgk', h, W_key)
    V = jnp.einsum('bgd,hdv->hbgv', h, W_val)
    compat = norm_factor * jnp.einsum('hbnk,hbgk->hbng', Q, K)
    if mask is not None:
        mask = jnp.asarray(mask)
        madd = jnp.where(mask, -1e9, 0.0) if mask.dtype == jnp.bool_ else mask
        compat = compat + madd[None].astype(compat.dtype)
    attn = jax.nn.softmax(compat, axis=-1)
    heads = jnp.einsum('hbng,hbgv->hbnv', attn, V)
    out = jnp.einsum('hbnv,hve->bne', heads, W_out)
    return out


if __name__ == "__main__":
    # Module hyper-params (small, consistent with the forward semantics).
    n_heads = 4
    input_dim = 32
    embed_dim = 32
    key_dim = val_dim = embed_dim // n_heads        # 8

    batch = 2
    n_query = 8
    graph_size = 8

    key = jax.random.PRNGKey(0)
    k_q, k_h, k_wq, k_wk, k_wv, k_wo, k_m = jax.random.split(key, 7)

    # Deterministic parameter init mimicking init_parameters():
    # uniform(-stdv, stdv) with stdv = 1/sqrt(param.size(-1)).
    def uinit(k, shape):
        stdv = 1.0 / math.sqrt(shape[-1])
        return jax.random.uniform(k, shape, jnp.float32, -stdv, stdv)

    W_query = uinit(k_wq, (n_heads, input_dim, key_dim))
    W_key = uinit(k_wk, (n_heads, input_dim, key_dim))
    W_val = uinit(k_wv, (n_heads, input_dim, val_dim))
    W_out = uinit(k_wo, (n_heads, key_dim, embed_dim))

    q = jax.random.normal(k_q, (batch, n_query, input_dim), jnp.float32)
    h = jax.random.normal(k_h, (batch, graph_size, input_dim), jnp.float32)

    # Masks: a byte-cheap boolean (B, Nq, G) mask and an un-broadcast additive
    # float (B, 1, G) mask; always keep >= 1 attendable node per row.
    blocked = jax.random.uniform(k_m, (batch, n_query, graph_size)) < 0.3
    blocked = blocked.at[:, :, 0].set(False)
    add_mask = jnp.where(blocked[:, :1, :], -1e9, 0.0).astype(jnp.float32)

    gen = _tpu_generation()
    auto_bf16 = gen in (6, 7)

    # f32 path checks exact module semantics tightly (softmax uses the EUP
    # approximate reciprocal, hence 5e-3); the bf16 MXU path (v6e/v7x only)
    # rounds the matmul operands to bfloat16 and gets a looser tolerance.
    modes = [("f32", jnp.float32, 5e-3)]
    if auto_bf16:
        modes.append(("bf16", jnp.bfloat16, 5e-2))

    checks = [
        ("no-mask", None),
        ("bool-mask", blocked),
        ("float-mask-Bq1", add_mask),
    ]

    for dtype_name, md, tol in modes:
        for name, m in checks:
            out = multi_head_attention(q, h, W_query, W_key, W_val, W_out,
                                       mask=m, mxu_dtype=md)
            out = jax.block_until_ready(out)
            ref = _reference(q, h, W_query, W_key, W_val, W_out, mask=m)
            assert out.shape == (batch, n_query, embed_dim)
            err = float(jnp.max(jnp.abs(out - ref)))
            assert jnp.allclose(out, ref, atol=tol, rtol=tol), \
                f"[{dtype_name}/{name}] max abs err {err}"

    print("KERNEL_OK")
</pallas_src>

<mosaic_0001>
module attributes {stable_mosaic.version = 11 : i64} {
  func.func @_mha_kernel(%arg0: i32, %arg1: memref<16x32xf32, #tpu.memory_space<vmem>>, %arg2: memref<16x32xf32, #tpu.memory_space<vmem>>, %arg3: memref<32x32xf32, #tpu.memory_space<vmem>>, %arg4: memref<32x32xf32, #tpu.memory_space<vmem>>, %arg5: memref<32x32xf32, #tpu.memory_space<vmem>>, %arg6: memref<32x32xf32, #tpu.memory_space<vmem>>, %arg7: memref<16x32xf32, #tpu.memory_space<vmem>>) attributes {dimension_semantics = [#tpu.dimension_semantics<parallel>], iteration_bounds = array<i64: 1>, scalar_prefetch = 0 : i64, scratch_operands = 0 : i64, tpu.core_type = #tpu.core_type<tc>, window_params = [{transform_indices = @transform_0, window_bounds = array<i64: 16, 32>}, {transform_indices = @transform_1, window_bounds = array<i64: 16, 32>}, {pipeline_mode = #tpu.pipeline_mode<synchronous>, transform_indices = @transform_2, window_bounds = array<i64: 32, 32>}, {pipeline_mode = #tpu.pipeline_mode<synchronous>, transform_indices = @transform_3, window_bounds = array<i64: 32, 32>}, {pipeline_mode = #tpu.pipeline_mode<synchronous>, transform_indices = @transform_4, window_bounds = array<i64: 32, 32>}, {pipeline_mode = #tpu.pipeline_mode<synchronous>, transform_indices = @transform_5, window_bounds = array<i64: 32, 32>}, {transform_indices = @transform_6, window_bounds = array<i64: 16, 32>}]} {
    %c0 = arith.constant 0 : index
    %c0_0 = arith.constant 0 : index
    %0 = vector.load %arg1[%c0, %c0_0] : memref<16x32xf32, #tpu.memory_space<vmem>>, vector<16x32xf32>
    %c0_1 = arith.constant 0 : index
    %c0_2 = arith.constant 0 : index
    %1 = vector.load %arg2[%c0_1, %c0_2] : memref<16x32xf32, #tpu.memory_space<vmem>>, vector<16x32xf32>
    %c0_3 = arith.constant 0 : index
    %c0_4 = arith.constant 0 : index
    %2 = vector.load %arg3[%c0_3, %c0_4] : memref<32x32xf32, #tpu.memory_space<vmem>>, vector<32x32xf32>
    %cst = arith.constant dense<0.000000e+00> : vector<16x32xf32>
    %3 = tpu.matmul %0, %2, %cst {dimension_numbers = #tpu.dot_dimension_numbers<[1], [0], [0], [1], [0, 0, 1, 1], [], []>} : vector<16x32xf32>, vector<32x32xf32>, vector<16x32xf32> -> vector<16x32xf32>
    %c0_5 = arith.constant 0 : index
    %c0_6 = arith.constant 0 : index
    %4 = vector.load %arg4[%c0_5, %c0_6] : memref<32x32xf32, #tpu.memory_space<vmem>>, vector<32x32xf32>
    %cst_7 = arith.constant dense<0.000000e+00> : vector<16x32xf32>
    %5 = tpu.matmul %1, %4, %cst_7 {dimension_numbers = #tpu.dot_dimension_numbers<[1], [0], [0], [1], [0, 0, 1, 1], [], []>} : vector<16x32xf32>, vector<32x32xf32>, vector<16x32xf32> -> vector<16x32xf32>
    %c0_8 = arith.constant 0 : index
    %c0_9 = arith.constant 0 : index
    %6 = vector.load %arg5[%c0_8, %c0_9] : memref<32x32xf32, #tpu.memory_space<vmem>>, vector<32x32xf32>
    %cst_10 = arith.constant dense<0.000000e+00> : vector<16x32xf32>
    %7 = tpu.matmul %1, %6, %cst_10 {dimension_numbers = #tpu.dot_dimension_numbers<[1], [0], [0], [1], [0, 0, 1, 1], [], []>} : vector<16x32xf32>, vector<32x32xf32>, vector<16x32xf32> -> vector<16x32xf32>
    %8 = vector.shape_cast %3 : vector<16x32xf32> to vector<2x8x32xf32>
    %9 = vector.shape_cast %5 : vector<16x32xf32> to vector<2x8x32xf32>
    %10 = vector.shape_cast %7 : vector<16x32xf32> to vector<2x8x32xf32>
    %11 = vector.extract_strided_slice %8 {offsets = [0, 0, 0], sizes = [2, 8, 8], strides = [1, 1, 1]} : vector<2x8x32xf32> to vector<2x8x8xf32>
    %12 = vector.extract_strided_slice %8 {offsets = [0, 0, 8], sizes = [2, 8, 8], strides = [1, 1, 1]} : vector<2x8x32xf32> to vector<2x8x8xf32>
    %13 = vector.extract_strided_slice %8 {offsets = [0, 0, 16], sizes = [2, 8, 8], strides = [1, 1, 1]} : vector<2x8x32xf32> to vector<2x8x8xf32>
    %14 = vector.extract_strided_slice %8 {offsets = [0, 0, 24], sizes = [2, 8, 8], strides = [1, 1, 1]} : vector<2x8x32xf32> to vector<2x8x8xf32>
    %15 = tpu.concatenate %11, %12, %13, %14 in 0 : vector<2x8x8xf32>, vector<2x8x8xf32>, vector<2x8x8xf32>, vector<2x8x8xf32> -> vector<8x8x8xf32>
    %16 = vector.extract_strided_slice %9 {offsets = [0, 0, 0], sizes = [2, 8, 8], strides = [1, 1, 1]} : vector<2x8x32xf32> to vector<2x8x8xf32>
    %17 = vector.extract_strided_slice %9 {offsets = [0, 0, 8], sizes = [2, 8, 8], strides = [1, 1, 1]} : vector<2x8x32xf32> to vector<2x8x8xf32>
    %18 = vector.extract_strided_slice %9 {offsets = [0, 0, 16], sizes = [2, 8, 8], strides = [1, 1, 1]} : vector<2x8x32xf32> to vector<2x8x8xf32>
    %19 = vector.extract_strided_slice %9 {offsets = [0, 0, 24], sizes = [2, 8, 8], strides = [1, 1, 1]} : vector<2x8x32xf32> to vector<2x8x8xf32>
    %20 = tpu.concatenate %16, %17, %18, %19 in 0 : vector<2x8x8xf32>, vector<2x8x8xf32>, vector<2x8x8xf32>, vector<2x8x8xf32> -> vector<8x8x8xf32>
    %21 = vector.extract_strided_slice %10 {offsets = [0, 0, 0], sizes = [2, 8, 8], strides = [1, 1, 1]} : vector<2x8x32xf32> to vector<2x8x8xf32>
    %22 = vector.extract_strided_slice %10 {offsets = [0, 0, 8], sizes = [2, 8, 8], strides = [1, 1, 1]} : vector<2x8x32xf32> to vector<2x8x8xf32>
    %23 = vector.extract_strided_slice %10 {offsets = [0, 0, 16], sizes = [2, 8, 8], strides = [1, 1, 1]} : vector<2x8x32xf32> to vector<2x8x8xf32>
    %24 = vector.extract_strided_slice %10 {offsets = [0, 0, 24], sizes = [2, 8, 8], strides = [1, 1, 1]} : vector<2x8x32xf32> to vector<2x8x8xf32>
    %25 = tpu.concatenate %21, %22, %23, %24 in 0 : vector<2x8x8xf32>, vector<2x8x8xf32>, vector<2x8x8xf32>, vector<2x8x8xf32> -> vector<8x8x8xf32>
    "tpu.trace_start"() <{level = 10 : i32, message = "znk,zgk->zng"}> : () -> ()
    %cst_11 = arith.constant dense<0.000000e+00> : vector<8x8x8xf32>
    %26 = tpu.matmul %15, %20, %cst_11 {dimension_numbers = #tpu.dot_dimension_numbers<[2], [2], [1], [1], [0, 0, 0, 1, 1, 1], [0], [0]>} : vector<8x8x8xf32>, vector<8x8x8xf32>, vector<8x8x8xf32> -> vector<8x8x8xf32>
    "tpu.trace_stop"() : () -> ()
    %cst_12 = arith.constant dense<0xFF800000> : vector<8x8xf32>
    %27 = vector.multi_reduction <maximumf>, %26, %cst_12 [2] : vector<8x8x8xf32> to vector<8x8xf32>
    %28 = vector.shape_cast %27 : vector<8x8xf32> to vector<8x8x1xf32>
    %29 = vector.broadcast %28 : vector<8x8x1xf32> to vector<8x8x8xf32>
    %30 = arith.subf %26, %29 : vector<8x8x8xf32>
    %31 = math.exp %30 : vector<8x8x8xf32>
    %cst_13 = arith.constant dense<0.000000e+00> : vector<8x8xf32>
    %32 = vector.multi_reduction <add>, %31, %cst_13 [2] : vector<8x8x8xf32> to vector<8x8xf32>
    %33 = vector.shape_cast %32 : vector<8x8xf32> to vector<8x8x1xf32>
    %34 = tpu.reciprocal %33 {approx = true} : vector<8x8x1xf32> -> vector<8x8x1xf32>
    %35 = vector.broadcast %34 : vector<8x8x1xf32> to vector<8x8x8xf32>
    %36 = arith.mulf %31, %35 : vector<8x8x8xf32>
    "tpu.trace_start"() <{level = 10 : i32, message = "zng,zgv->znv"}> : () -> ()
    %cst_14 = arith.constant dense<0.000000e+00> : vector<8x8x8xf32>
    %37 = tpu.matmul %36, %25, %cst_14 {dimension_numbers = #tpu.dot_dimension_numbers<[2], [1], [1], [2], [0, 0, 0, 1, 1, 2], [0], [0]>} : vector<8x8x8xf32>, vector<8x8x8xf32>, vector<8x8x8xf32> -> vector<8x8x8xf32>
    "tpu.trace_stop"() : () -> ()
    %38 = vector.shape_cast %37 : vector<8x8x8xf32> to vector<4x2x8x8xf32>
    %39 = vector.extract_strided_slice %38 {offsets = [0, 0, 0, 0], sizes = [1, 2, 8, 8], strides = [1, 1, 1, 1]} : vector<4x2x8x8xf32> to vector<1x2x8x8xf32>
    %40 = vector.shape_cast %39 : vector<1x2x8x8xf32> to vector<2x8x8xf32>
    %41 = vector.extract_strided_slice %38 {offsets = [1, 0, 0, 0], sizes = [1, 2, 8, 8], strides = [1, 1, 1, 1]} : vector<4x2x8x8xf32> to vector<1x2x8x8xf32>
    %42 = vector.shape_cast %41 : vector<1x2x8x8xf32> to vector<2x8x8xf32>
    %43 = vector.extract_strided_slice %38 {offsets = [2, 0, 0, 0], sizes = [1, 2, 8, 8], strides = [1, 1, 1, 1]} : vector<4x2x8x8xf32> to vector<1x2x8x8xf32>
    %44 = vector.shape_cast %43 : vector<1x2x8x8xf32> to vector<2x8x8xf32>
    %45 = vector.extract_strided_slice %38 {offsets = [3, 0, 0, 0], sizes = [1, 2, 8, 8], strides = [1, 1, 1, 1]} : vector<4x2x8x8xf32> to vector<1x2x8x8xf32>
    %46 = vector.shape_cast %45 : vector<1x2x8x8xf32> to vector<2x8x8xf32>
    %47 = tpu.concatenate %40, %42, %44, %46 in 2 : vector<2x8x8xf32>, vector<2x8x8xf32>, vector<2x8x8xf32>, vector<2x8x8xf32> -> vector<2x8x32xf32>
    %48 = vector.shape_cast %47 : vector<2x8x32xf32> to vector<16x32xf32>
    %c0_15 = arith.constant 0 : index
    %c0_16 = arith.constant 0 : index
    %49 = vector.load %arg6[%c0_15, %c0_16] : memref<32x32xf32, #tpu.memory_space<vmem>>, vector<32x32xf32>
    %cst_17 = arith.constant dense<0.000000e+00> : vector<16x32xf32>
    %50 = tpu.matmul %48, %49, %cst_17 {dimension_numbers = #tpu.dot_dimension_numbers<[1], [0], [0], [1], [0, 0, 1, 1], [], []>} : vector<16x32xf32>, vector<32x32xf32>, vector<16x32xf32> -> vector<16x32xf32>
    %c0_18 = arith.constant 0 : index
    %c0_19 = arith.constant 0 : index
    %51 = vector.load %arg7[%c0_18, %c0_19] : memref<16x32xf32, #tpu.memory_space<vmem>>, vector<16x32xf32>
    tpu.vector_store %arg7[%c0_18, %c0_19], %50 {strides = array<i32>} : memref<16x32xf32, #tpu.memory_space<vmem>>, vector<16x32xf32>,
    return
  }
  func.func @transform_0(%arg0: i32) -> (i32, i32) {
    %c0_i32 = arith.constant 0 : i32
    %c0_i32_0 = arith.constant 0 : i32
    return %arg0, %c0_i32 : i32, i32
  }
  func.func @transform_1(%arg0: i32) -> (i32, i32) {
    %c0_i32 = arith.constant 0 : i32
    %c0_i32_0 = arith.constant 0 : i32
    return %arg0, %c0_i32 : i32, i32
  }
  func.func @transform_2(%arg0: i32) -> (i32, i32) {
    %c0_i32 = arith.constant 0 : i32
    %c0_i32_0 = arith.constant 0 : i32
    %c0_i32_1 = arith.constant 0 : i32
    return %c0_i32, %c0_i32_0 : i32, i32
  }
  func.func @transform_3(%arg0: i32) -> (i32, i32) {
    %c0_i32 = arith.constant 0 : i32
    %c0_i32_0 = arith.constant 0 : i32
    %c0_i32_1 = arith.constant 0 : i32
    return %c0_i32, %c0_i32_0 : i32, i32
  }
  func.func @transform_4(%arg0: i32) -> (i32, i32) {
    %c0_i32 = arith.constant 0 : i32
    %c0_i32_0 = arith.constant 0 : i32
    %c0_i32_1 = arith.constant 0 : i32
    return %c0_i32, %c0_i32_0 : i32, i32
  }
  func.func @transform_5(%arg0: i32) -> (i32, i32) {
    %c0_i32 = arith.constant 0 : i32
    %c0_i32_0 = arith.constant 0 : i32
    %c0_i32_1 = arith.constant 0 : i32
    return %c0_i32, %c0_i32_0 : i32, i32
  }
  func.func @transform_6(%arg0: i32) -> (i32, i32) {
    %c0_i32 = arith.constant 0 : i32
    %c0_i32_0 = arith.constant 0 : i32
    return %arg0, %c0_i32 : i32, i32
  }
}

</mosaic_0001>

<llo_original>
// kernel: tpu_custom_call.1
$region0: #{tpu_custom_call.1}
  #allocation0 [shape = 'u32[]', space=smem, size = 0x4, offset = 0x4, fixed_abs, tag = 'smem constant byte address 0x4 - core index']
  #allocation1 [shape = 'u32[144,128]{1,0:T(1,128)}', space=vmem, size = 0x12000, scoped, tag = 'internal scratch']
  %s0 = inlined_call_operand.hbm [shape: f32[16,32], index: 0, kind: input, shape index: {}]
  %s1 = inlined_call_operand.hbm [shape: f32[16,32], index: 1, kind: input, shape index: {}]
  %s2 = inlined_call_operand.hbm [shape: f32[32,32], index: 2, kind: input, shape index: {}]
  %s3 = inlined_call_operand.hbm [shape: f32[32,32], index: 3, kind: input, shape index: {}]
  %s4 = inlined_call_operand.hbm [shape: f32[32,32], index: 4, kind: input, shape index: {}]
  %s5 = inlined_call_operand.hbm [shape: f32[32,32], index: 5, kind: input, shape index: {}]
  %s6 = inlined_call_operand.hbm [shape: f32[16,32], index: 6, kind: output, shape index: {}]
  %s7 = sld [smem:[#allocation0]]
  $region58: #{tpu_custom_call.1} parent=0
    _
  %s9 = ssub.s32 1, %s7
  %s10 = scalar_select 0, %s9, %s7
  $region1: #{tpu_custom_call.1} parent=0
    #allocation2 [shape = 'u8[8192]{0}', space=vmem, size = 0x2000, scoped, tag = 'input window, operand 0, single buffered']
    #allocation3 [shape = 's32[1]{0}', space=sflag, size = 0x4, scoped, tag = 'scoped memory for tpu_custom_call.1']
    #allocation4 [shape = 's32[1]{0}', space=sflag, size = 0x4, scoped, tag = 'scoped memory for tpu_custom_call.1']
    #allocation5 [shape = 'u8[8192]{0}', space=vmem, size = 0x2000, scoped, tag = 'input window, operand 1, single buffered']
    #allocation6 [shape = 's32[1]{0}', space=sflag, size = 0x4, scoped, tag = 'scoped memory for tpu_custom_call.1']
    #allocation7 [shape = 'u8[16384]{0}', space=vmem, size = 0x4000, scoped, tag = 'input window, operand 2, single buffered']
    #allocation8 [shape = 'u8[16384]{0}', space=vmem, size = 0x4000, scoped, tag = 'input window, operand 3, single buffered']
    #allocation9 [shape = 's32[1]{0}', space=sflag, size = 0x4, scoped, tag = 'scoped memory for tpu_custom_call.1']
    #allocation10 [shape = 'u8[16384]{0}', space=vmem, size = 0x4000, scoped, tag = 'input window, operand 4, single buffered']
    #allocation11 [shape = 'u8[16384]{0}', space=vmem, size = 0x4000, scoped, tag = 'input window, operand 5, single buffered']
    #allocation12 [shape = 's32[1]{0}', space=sflag, size = 0x4, scoped, tag = 'scoped memory for tpu_custom_call.1']
    #allocation13 [shape = 'u8[8192]{0}', space=vmem, size = 0x2000, scoped, tag = 'output window, operand 0, single buffered']
    %11 = vsyncpa [#allocation3], 0
    %12 = vsyncpa [#allocation6], 0
    %13 = vsyncpa [#allocation9], 0
    %14 = vsyncpa [#allocation12], 0
    %15 = vsyncpa [#allocation4], 0
    // Predicated region
    $region2: #{tpu_custom_call.1} parent=1 // pred_check
      _
    $region3: #{tpu_custom_call.1} parent=1 // pred_check_branch
      %17 = sbr.rel (0) target = $region5
    $region4: #{tpu_custom_call.1} parent=1 // pred_region
      %s19 = ssub.s32 256, 256
      %20 = vsyncadd [#allocation3], %s19
      %s21 = sshll.u32 [#allocation2], 4
      %s22 = int_to_ptr.vmem [resolvable:$true] %s21
      %27 = dma.hbm_to_vmem [thread:$0]  %s0, 256, %s22, [#allocation3], 128, 128, 8
    $region5: #{tpu_custom_call.1} parent=1 // pred_fallthru
      _
    // Predicated region
    $region6: #{tpu_custom_call.1} parent=1 // pred_check
      _
    $region7: #{tpu_custom_call.1} parent=1 // pred_check_branch
      %29 = sbr.rel (0) target = $region9
    $region8: #{tpu_custom_call.1} parent=1 // pred_region
      %s31 = ssub.s32 256, 256
      %32 = vsyncadd [#allocation6], %s31
      %s33 = sshll.u32 [#allocation5], 4
      %s34 = int_to_ptr.vmem [resolvable:$true] %s33
      %39 = dma.hbm_to_vmem [thread:$0]  %s1, 256, %s34, [#allocation6], 128, 128, 8
    $region9: #{tpu_custom_call.1} parent=1 // pred_fallthru
      _
    // Predicated region
    $region10: #{tpu_custom_call.1} parent=1 // pred_check
      _
    $region11: #{tpu_custom_call.1} parent=1 // pred_check_branch
      %41 = sbr.rel (0) target = $region13
    $region12: #{tpu_custom_call.1} parent=1 // pred_region
      %s43 = ssub.s32 512, 512
      %44 = vsyncadd [#allocation6], %s43
      %s45 = sshll.u32 [#allocation7], 4
      %s46 = int_to_ptr.vmem [resolvable:$true] %s45
      %51 = dma.hbm_to_vmem [thread:$0]  %s2, 512, %s46, [#allocation6], 128, 128, 8
    $region13: #{tpu_custom_call.1} parent=1 // pred_fallthru
      _
    // Predicated region
    $region14: #{tpu_custom_call.1} parent=1 // pred_check
      _
    $region15: #{tpu_custom_call.1} parent=1 // pred_check_branch
      %53 = sbr.rel (0) target = $region17
    $region16: #{tpu_custom_call.1} parent=1 // pred_region
      %s55 = ssub.s32 512, 512
      %56 = vsyncadd [#allocation9], %s55
      %s57 = sshll.u32 [#allocation8], 4
      %s58 = int_to_ptr.vmem [resolvable:$true] %s57
      %63 = dma.hbm_to_vmem [thread:$0]  %s3, 512, %s58, [#allocation9], 128, 128, 8
    $region17: #{tpu_custom_call.1} parent=1 // pred_fallthru
      _
    // Predicated region
    $region18: #{tpu_custom_call.1} parent=1 // pred_check
      _
    $region19: #{tpu_custom_call.1} parent=1 // pred_check_branch
      %65 = sbr.rel (0) target = $region21
    $region20: #{tpu_custom_call.1} parent=1 // pred_region
      %s67 = ssub.s32 512, 512
      %68 = vsyncadd [#allocation9], %s67
      %s69 = sshll.u32 [#allocation10], 4
      %s70 = int_to_ptr.vmem [resolvable:$true] %s69
      %75 = dma.hbm_to_vmem [thread:$0]  %s4, 512, %s70, [#allocation9], 128, 128, 8
    $region21: #{tpu_custom_call.1} parent=1 // pred_fallthru
      _
    // Predicated region
    $region22: #{tpu_custom_call.1} parent=1 // pred_check
      _
    $region23: #{tpu_custom_call.1} parent=1 // pred_check_branch
      %77 = sbr.rel (0) target = $region25
    $region24: #{tpu_custom_call.1} parent=1 // pred_region
      %s79 = ssub.s32 512, 512
      %80 = vsyncadd [#allocation12], %s79
      %s81 = sshll.u32 [#allocation11], 4
      %s82 = int_to_ptr.vmem [resolvable:$true] %s81
      %87 = dma.hbm_to_vmem [thread:$0]  %s5, 512, %s82, [#allocation12], 128, 128, 8
    $region25: #{tpu_custom_call.1} parent=1 // pred_fallthru
      _
    // Predicated region
    $region26: #{tpu_custom_call.1} parent=1 // pred_check
      _
    $region27: #{tpu_custom_call.1} parent=1 // pred_check_branch
      %89 = sbr.rel (0) target = $region29
    $region28: #{tpu_custom_call.1} parent=1 // pred_region
      %90 = dma.done [#allocation3], 256
    $region29: #{tpu_custom_call.1} parent=1 // pred_fallthru
      _
    // Predicated region
    $region30: #{tpu_custom_call.1} parent=1 // pred_check
      _
    $region31: #{tpu_custom_call.1} parent=1 // pred_check_branch
      %92 = sbr.rel (0) target = $region33
    $region32: #{tpu_custom_call.1} parent=1 // pred_region
      %93 = dma.done [#allocation6], 256
    $region33: #{tpu_custom_call.1} parent=1 // pred_fallthru
      _
    // Predicated region
    $region34: #{tpu_custom_call.1} parent=1 // pred_check
      _
    $region35: #{tpu_custom_call.1} parent=1 // pred_check_branch
      %95 = sbr.rel (0) target = $region37
    $region36: #{tpu_custom_call.1} parent=1 // pred_region
      %96 = dma.done [#allocation6], 512
    $region37: #{tpu_custom_call.1} parent=1 // pred_fallthru
      _
    // Predicated region
    $region38: #{tpu_custom_call.1} parent=1 // pred_check
      _
    $region39: #{tpu_custom_call.1} parent=1 // pred_check_branch
      %98 = sbr.rel (0) target = $region41
    $region40: #{tpu_custom_call.1} parent=1 // pred_region
      %99 = dma.done [#allocation9], 512
    $region41: #{tpu_custom_call.1} parent=1 // pred_fallthru
      _
    // Predicated region
    $region42: #{tpu_custom_call.1} parent=1 // pred_check
      _
    $region43: #{tpu_custom_call.1} parent=1 // pred_check_branch
      %101 = sbr.rel (0) target = $region45
    $region44: #{tpu_custom_call.1} parent=1 // pred_region
      %102 = dma.done [#allocation9], 512
    $region45: #{tpu_custom_call.1} parent=1 // pred_fallthru
      _
    // Predicated region
    $region46: #{tpu_custom_call.1} parent=1 // pred_check
      _
    $region47: #{tpu_custom_call.1} parent=1 // pred_check_branch
      %104 = sbr.rel (0) target = $region49
    $region48: #{tpu_custom_call.1} parent=1 // pred_region
      %105 = dma.done [#allocation12], 512
    $region49: #{tpu_custom_call.1} parent=1 // pred_fallthru
      _
    %v106 = vld [vmem:[#allocation2] sm:$0xff]
    %v107 = vld [vmem:[#allocation2 + $0x8] sm:$0xff]
    %v108 = vld [vmem:[#allocation5] sm:$0xff]
    %v109 = vld [vmem:[#allocation5 + $0x8] sm:$0xff]
    %v110 = vld [vmem:[#allocation7] sm:$0xff]
    %v111 = vld [vmem:[#allocation7 + $0x8] sm:$0xff]
    %v112 = vld [vmem:[#allocation7 + $0x10] sm:$0xff]
    %v113 = vld [vmem:[#allocation7 + $0x18] sm:$0xff]
    %vm114 = vcmask 261120
    %v116 = vsel %vm114, %v106, 0
    %v119 = vsel %vm114, %v107, 0
    %121 = vmatprep.subr.mxu0 0.0
    %122 = vmatpush1.msra.mxu0 %v110
    %123 = vmatprep.subr.mxu0 0.0
    %124 = vmatpush1.msra.mxu0 %v111
    %125 = vmatprep.subr.mxu0 0.0
    %126 = vmatpush1.msra.mxu0 %v112
    %127 = vmatprep.subr.mxu0 0.0
    %128 = vmatpush1.msra.mxu0 %v113
    %129 = vmatprep.subr.mxu0 0.0
    %130 = vmatpush1.msra.mxu0 0.0
    %131 = vmatprep.subr.mxu0 0.0
    %132 = vmatpush1.msra.mxu0 0.0
    %133 = vmatprep.subr.mxu0 0.0
    %134 = vmatpush1.msra.mxu0 0.0
    %135 = vmatprep.subr.mxu0 0.0
    %136 = vmatpush1.msra.mxu0 0.0
    %137 = vmatprep.subr.mxu0 0.0
    %138 = vmatpush1.msra.mxu0 0.0
    %139 = vmatprep.subr.mxu0 0.0
    %140 = vmatpush1.msra.mxu0 0.0
    %141 = vmatprep.subr.mxu0 0.0
    %142 = vmatpush1.msra.mxu0 0.0
    %143 = vmatprep.subr.mxu0 0.0
    %144 = vmatpush1.msra.mxu0 0.0
    %145 = vmatprep.subr.mxu0 0.0
    %146 = vmatpush1.msra.mxu0 0.0
    %147 = vmatprep.subr.mxu0 0.0
    %148 = vmatpush1.msra.mxu0 0.0
    %149 = vmatprep.subr.mxu0 0.0
    %150 = vmatpush1.msra.mxu0 0.0
    %151 = vmatprep.subr.mxu0 0.0
    %152 = vmatpush1.msra.mxu0 0.0
    %153 = vmatprep.subr.mxu0 0.0
    %154 = vmatpush1.msra.mxu0 0.0
    %155 = vmatprep.subr.mxu0 0.0
    %156 = vmatpush1.msra.mxu0 0.0
    %157 = vmatprep.subr.mxu0 0.0
    %158 = vmatpush1.msra.mxu0 0.0
    %159 = vmatprep.subr.mxu0 0.0
    %160 = vmatpush1.msra.mxu0 0.0
    %161 = vmatprep.subr.mxu0 0.0
    %162 = vmatpush1.msra.mxu0 0.0
    %163 = vmatprep.subr.mxu0 0.0
    %164 = vmatpush1.msra.mxu0 0.0
    %165 = vmatprep.subr.mxu0 0.0
    %166 = vmatpush1.msra.mxu0 0.0
    %167 = vmatprep.subr.mxu0 0.0
    %168 = vmatpush1.msra.mxu0 0.0
    %169 = vmatprep.subr.mxu0 0.0
    %170 = vmatpush1.msra.mxu0 0.0
    %171 = vmatprep.subr.mxu0 0.0
    %172 = vmatpush1.msra.mxu0 0.0
    %173 = vmatprep.subr.mxu0 0.0
    %174 = vmatpush1.msra.mxu0 0.0
    %175 = vmatprep.subr.mxu0 0.0
    %176 = vmatpush1.msra.mxu0 0.0
    %177 = vmatprep.subr.mxu0 0.0
    %178 = vmatpush1.msra.mxu0 0.0
    %179 = vmatprep.subr.mxu0 0.0
    %180 = vmatpush1.msra.mxu0 0.0
    %181 = vmatprep.subr.mxu0 0.0
    %182 = vmatpush1.msra.mxu0 0.0
    %183 = vmatprep.subr.mxu0 0.0
    %184 = vmatpush1.msra.mxu0 0.0
    %185 = vmatprep.mubr.f32.mxu0 0.0
    %186 = vmatmul.mubr.f32.gmra.mrb[0].mxu0 %v116
    %v187 = vpop.f32.mrb[0].mxu0
    %v188 = vadd.f32 0.0, %v187
    %v189 = vpop.f32.mrb[0].mxu0
    %190 = vmatprep.mubr.f32.mxu0 0.0
    %191 = vmatmul.mubr.f32.gmra.mrb[0].mxu0 %v119
    %v192 = vpop.f32.mrb[0].mxu0
    %v193 = vadd.f32 0.0, %v192
    %v194 = vpop.f32.mrb[0].mxu0
    %195 = vdwg.mxu0
    %v196 = vld [vmem:[#allocation8] sm:$0xff]
    %v197 = vld [vmem:[#allocation8 + $0x8] sm:$0xff]
    %v198 = vld [vmem:[#allocation8 + $0x10] sm:$0xff]
    %v199 = vld [vmem:[#allocation8 + $0x18] sm:$0xff]
    %v201 = vsel %vm114, %v108, 0
    %v204 = vsel %vm114, %v109, 0
    %206 = vmatprep.subr.mxu0 0.0
    %207 = vmatpush1.msra.mxu0 %v196
    %208 = vmatprep.subr.mxu0 0.0
    %209 = vmatpush1.msra.mxu0 %v197
    %210 = vmatprep.subr.mxu0 0.0
    %211 = vmatpush1.msra.mxu0 %v198
    %212 = vmatprep.subr.mxu0 0.0
    %213 = vmatpush1.msra.mxu0 %v199
    %214 = vmatprep.subr.mxu0 0.0
    %215 = vmatpush1.msra.mxu0 0.0
    %216 = vmatprep.subr.mxu0 0.0
    %217 = vmatpush1.msra.mxu0 0.0
    %218 = vmatprep.subr.mxu0 0.0
    %219 = vmatpush1.msra.mxu0 0.0
    %220 = vmatprep.subr.mxu0 0.0
    %221 = vmatpush1.msra.mxu0 0.0
    %222 = vmatprep.subr.mxu0 0.0
    %223 = vmatpush1.msra.mxu0 0.0
    %224 = vmatprep.subr.mxu0 0.0
    %225 = vmatpush1.msra.mxu0 0.0
    %226 = vmatprep.subr.mxu0 0.0
    %227 = vmatpush1.msra.mxu0 0.0
    %228 = vmatprep.subr.mxu0 0.0
    %229 = vmatpush1.msra.mxu0 0.0
    %230 = vmatprep.subr.mxu0 0.0
    %231 = vmatpush1.msra.mxu0 0.0
    %232 = vmatprep.subr.mxu0 0.0
    %233 = vmatpush1.msra.mxu0 0.0
    %234 = vmatprep.subr.mxu0 0.0
    %235 = vmatpush1.msra.mxu0 0.0
    %236 = vmatprep.subr.mxu0 0.0
    %237 = vmatpush1.msra.mxu0 0.0
    %238 = vmatprep.subr.mxu0 0.0
    %239 = vmatpush1.msra.mxu0 0.0
    %240 = vmatprep.subr.mxu0 0.0
    %241 = vmatpush1.msra.mxu0 0.0
    %242 = vmatprep.subr.mxu0 0.0
    %243 = vmatpush1.msra.mxu0 0.0
    %244 = vmatprep.subr.mxu0 0.0
    %245 = vmatpush1.msra.mxu0 0.0
    %246 = vmatprep.subr.mxu0 0.0
    %247 = vmatpush1.msra.mxu0 0.0
    %248 = vmatprep.subr.mxu0 0.0
    %249 = vmatpush1.msra.mxu0 0.0
    %250 = vmatprep.subr.mxu0 0.0
    %251 = vmatpush1.msra.mxu0 0.0
    %252 = vmatprep.subr.mxu0 0.0
    %253 = vmatpush1.msra.mxu0 0.0
    %254 = vmatprep.subr.mxu0 0.0
    %255 = vmatpush1.msra.mxu0 0.0
    %256 = vmatprep.subr.mxu0 0.0
    %257 = vmatpush1.msra.mxu0 0.0
    %258 = vmatprep.subr.mxu0 0.0
    %259 = vmatpush1.msra.mxu0 0.0
    %260 = vmatprep.subr.mxu0 0.0
    %261 = vmatpush1.msra.mxu0 0.0
    %262 = vmatprep.subr.mxu0 0.0
    %263 = vmatpush1.msra.mxu0 0.0
    %264 = vmatprep.subr.mxu0 0.0
    %265 = vmatpush1.msra.mxu0 0.0
    %266 = vmatprep.subr.mxu0 0.0
    %267 = vmatpush1.msra.mxu0 0.0
    %268 = vmatprep.subr.mxu0 0.0
    %269 = vmatpush1.msra.mxu0 0.0
    %270 = vmatprep.mubr.f32.mxu0 0.0
    %271 = vmatmul.mubr.f32.gmra.mrb[0].mxu0 %v201
    %v272 = vpop.f32.mrb[0].mxu0
    %v273 = vadd.f32 0.0, %v272
    %v274 = vpop.f32.mrb[0].mxu0
    %275 = vmatprep.mubr.f32.mxu0 0.0
    %276 = vmatmul.mubr.f32.gmra.mrb[0].mxu0 %v204
    %v277 = vpop.f32.mrb[0].mxu0
    %v278 = vadd.f32 0.0, %v277
    %v279 = vpop.f32.mrb[0].mxu0
    %280 = vdwg.mxu0
    %v281 = vld [vmem:[#allocation10] sm:$0xff]
    %v282 = vld [vmem:[#allocation10 + $0x8] sm:$0xff]
    %v283 = vld [vmem:[#allocation10 + $0x10] sm:$0xff]
    %v284 = vld [vmem:[#allocation10 + $0x18] sm:$0xff]
    %285 = vmatprep.subr.mxu0 0.0
    %286 = vmatpush1.msra.mxu0 %v281
    %287 = vmatprep.subr.mxu0 0.0
    %288 = vmatpush1.msra.mxu0 %v282
    %289 = vmatprep.subr.mxu0 0.0
    %290 = vmatpush1.msra.mxu0 %v283
    %291 = vmatprep.subr.mxu0 0.0
    %292 = vmatpush1.msra.mxu0 %v284
    %293 = vmatprep.subr.mxu0 0.0
    %294 = vmatpush1.msra.mxu0 0.0
    %295 = vmatprep.subr.mxu0 0.0
    %296 = vmatpush1.msra.mxu0 0.0
    %297 = vmatprep.subr.mxu0 0.0
    %298 = vmatpush1.msra.mxu0 0.0
    %299 = vmatprep.subr.mxu0 0.0
    %300 = vmatpush1.msra.mxu0 0.0
    %301 = vmatprep.subr.mxu0 0.0
    %302 = vmatpush1.msra.mxu0 0.0
    %303 = vmatprep.subr.mxu0 0.0
    %304 = vmatpush1.msra.mxu0 0.0
    %305 = vmatprep.subr.mxu0 0.0
    %306 = vmatpush1.msra.mxu0 0.0
    %307 = vmatprep.subr.mxu0 0.0
    %308 = vmatpush1.msra.mxu0 0.0
    %309 = vmatprep.subr.mxu0 0.0
    %310 = vmatpush1.msra.mxu0 0.0
    %311 = vmatprep.subr.mxu0 0.0
    %312 = vmatpush1.msra.mxu0 0.0
    %313 = vmatprep.subr.mxu0 0.0
    %314 = vmatpush1.msra.mxu0 0.0
    %315 = vmatprep.subr.mxu0 0.0
    %316 = vmatpush1.msra.mxu0 0.0
    %317 = vmatprep.subr.mxu0 0.0
    %318 = vmatpush1.msra.mxu0 0.0
    %319 = vmatprep.subr.mxu0 0.0
    %320 = vmatpush1.msra.mxu0 0.0
    %321 = vmatprep.subr.mxu0 0.0
    %322 = vmatpush1.msra.mxu0 0.0
    %323 = vmatprep.subr.mxu0 0.0
    %324 = vmatpush1.msra.mxu0 0.0
    %325 = vmatprep.subr.mxu0 0.0
    %326 = vmatpush1.msra.mxu0 0.0
    %327 = vmatprep.subr.mxu0 0.0
    %328 = vmatpush1.msra.mxu0 0.0
    %329 = vmatprep.subr.mxu0 0.0
    %330 = vmatpush1.msra.mxu0 0.0
    %331 = vmatprep.subr.mxu0 0.0
    %332 = vmatpush1.msra.mxu0 0.0
    %333 = vmatprep.subr.mxu0 0.0
    %334 = vmatpush1.msra.mxu0 0.0
    %335 = vmatprep.subr.mxu0 0.0
    %336 = vmatpush1.msra.mxu0 0.0
    %337 = vmatprep.subr.mxu0 0.0
    %338 = vmatpush1.msra.mxu0 0.0
    %339 = vmatprep.subr.mxu0 0.0
    %340 = vmatpush1.msra.mxu0 0.0
    %341 = vmatprep.subr.mxu0 0.0
    %342 = vmatpush1.msra.mxu0 0.0
    %343 = vmatprep.subr.mxu0 0.0
    %344 = vmatpush1.msra.mxu0 0.0
    %345 = vmatprep.subr.mxu0 0.0
    %346 = vmatpush1.msra.mxu0 0.0
    %347 = vmatprep.subr.mxu0 0.0
    %348 = vmatpush1.msra.mxu0 0.0
    %349 = vmatprep.mubr.f32.mxu0 0.0
    %350 = vmatmul.mubr.f32.gmra.mrb[0].mxu0 %v201
    %v351 = vpop.f32.mrb[0].mxu0
    %v352 = vadd.f32 0.0, %v351
    %v353 = vpop.f32.mrb[0].mxu0
    %354 = vmatprep.mubr.f32.mxu0 0.0
    %355 = vmatmul.mubr.f32.gmra.mrb[0].mxu0 %v204
    %v356 = vpop.f32.mrb[0].mxu0
    %v357 = vadd.f32 0.0, %v356
    %v358 = vpop.f32.mrb[0].mxu0
    %359 = vdwg.mxu0
    %362 = vrot.lane.b32.xlu0 %v188, 120
    %v363 = vpop.permute.xlu0 %362
    %364 = vrot.lane.b32.xlu0 %v193, 120
    %v365 = vpop.permute.xlu0 %364
    %366 = vrot.lane.b32.xlu0 %v188, 112
    %v367 = vpop.permute.xlu0 %366
    %368 = vrot.lane.b32.xlu0 %v193, 112
    %v369 = vpop.permute.xlu0 %368
    %370 = vrot.lane.b32.xlu0 %v188, 104
    %v371 = vpop.permute.xlu0 %370
    %372 = vrot.lane.b32.xlu0 %v193, 104
    %v373 = vpop.permute.xlu0 %372
    %376 = vrot.lane.b32.xlu0 %v273, 120
    %v377 = vpop.permute.xlu0 %376
    %378 = vrot.lane.b32.xlu0 %v278, 120
    %v379 = vpop.permute.xlu0 %378
    %380 = vrot.lane.b32.xlu0 %v273, 112
    %v381 = vpop.permute.xlu0 %380
    %382 = vrot.lane.b32.xlu0 %v278, 112
    %v383 = vpop.permute.xlu0 %382
    %384 = vrot.lane.b32.xlu0 %v273, 104
    %v385 = vpop.permute.xlu0 %384
    %386 = vrot.lane.b32.xlu0 %v278, 104
    %v387 = vpop.permute.xlu0 %386
    %390 = vrot.lane.b32.xlu0 %v352, 120
    %v391 = vpop.permute.xlu0 %390
    %392 = vrot.lane.b32.xlu0 %v357, 120
    %v393 = vpop.permute.xlu0 %392
    %396 = vrot.lane.b32.xlu0 %v352, 112
    %v397 = vpop.permute.xlu0 %396
    %398 = vrot.lane.b32.xlu0 %v357, 112
    %v399 = vpop.permute.xlu0 %398
    %402 = vrot.lane.b32.xlu0 %v352, 104
    %v403 = vpop.permute.xlu0 %402
    %404 = vrot.lane.b32.xlu0 %v357, 104
    %v405 = vpop.permute.xlu0 %404
    %vm408 = vcmask 64512
    %v409 = vsel %vm408, %v188, 0
    %v411 = vsel %vm408, %v273, 0
    %413 = vmatprep.subr.mxu0 0.0
    %414 = vmatpush1.xpose.msra.mxu0 %v411
    %415 = vmatprep.subr.mxu0 0.0
    %416 = vmatpush1.xpose.msra.mxu0 0.0
    %417 = vmatprep.subr.mxu0 0.0
    %418 = vmatpush1.xpose.msra.mxu0 0.0
    %419 = vmatprep.subr.mxu0 0.0
    %420 = vmatpush1.xpose.msra.mxu0 0.0
    %421 = vmatprep.subr.mxu0 0.0
    %422 = vmatpush1.xpose.msra.mxu0 0.0
    %423 = vmatprep.subr.mxu0 0.0
    %424 = vmatpush1.xpose.msra.mxu0 0.0
    %425 = vmatprep.subr.mxu0 0.0
    %426 = vmatpush1.xpose.msra.mxu0 0.0
    %427 = vmatprep.subr.mxu0 0.0
    %428 = vmatpush1.xpose.msra.mxu0 0.0
    %429 = vmatprep.subr.mxu0 0.0
    %430 = vmatpush1.xpose.msra.mxu0 0.0
    %431 = vmatprep.subr.mxu0 0.0
    %432 = vmatpush1.xpose.msra.mxu0 0.0
    %433 = vmatprep.subr.mxu0 0.0
    %434 = vmatpush1.xpose.msra.mxu0 0.0
    %435 = vmatprep.subr.mxu0 0.0
    %436 = vmatpush1.xpose.msra.mxu0 0.0
    %437 = vmatprep.subr.mxu0 0.0
    %438 = vmatpush1.xpose.msra.mxu0 0.0
    %439 = vmatprep.subr.mxu0 0.0
    %440 = vmatpush1.xpose.msra.mxu0 0.0
    %441 = vmatprep.subr.mxu0 0.0
    %442 = vmatpush1.xpose.msra.mxu0 0.0
    %443 = vmatprep.subr.mxu0 0.0
    %444 = vmatpush1.xpose.msra.mxu0 0.0
    %445 = vmatprep.subr.mxu0 0.0
    %446 = vmatpush1.xpose.msra.mxu0 0.0
    %447 = vmatprep.subr.mxu0 0.0
    %448 = vmatpush1.xpose.msra.mxu0 0.0
    %449 = vmatprep.subr.mxu0 0.0
    %450 = vmatpush1.xpose.msra.mxu0 0.0
    %451 = vmatprep.subr.mxu0 0.0
    %452 = vmatpush1.xpose.msra.mxu0 0.0
    %453 = vmatprep.subr.mxu0 0.0
    %454 = vmatpush1.xpose.msra.mxu0 0.0
    %455 = vmatprep.subr.mxu0 0.0
    %456 = vmatpush1.xpose.msra.mxu0 0.0
    %457 = vmatprep.subr.mxu0 0.0
    %458 = vmatpush1.xpose.msra.mxu0 0.0
    %459 = vmatprep.subr.mxu0 0.0
    %460 = vmatpush1.xpose.msra.mxu0 0.0
    %461 = vmatprep.subr.mxu0 0.0
    %462 = vmatpush1.xpose.msra.mxu0 0.0
    %463 = vmatprep.subr.mxu0 0.0
    %464 = vmatpush1.xpose.msra.mxu0 0.0
    %465 = vmatprep.subr.mxu0 0.0
    %466 = vmatpush1.xpose.msra.mxu0 0.0
    %467 = vmatprep.subr.mxu0 0.0
    %468 = vmatpush1.xpose.msra.mxu0 0.0
    %469 = vmatprep.subr.mxu0 0.0
    %470 = vmatpush1.xpose.msra.mxu0 0.0
    %471 = vmatprep.subr.mxu0 0.0
    %472 = vmatpush1.xpose.msra.mxu0 0.0
    %473 = vmatprep.subr.mxu0 0.0
    %474 = vmatpush1.xpose.msra.mxu0 0.0
    %475 = vmatprep.subr.mxu0 0.0
    %476 = vmatpush1.xpose.msra.mxu0 0.0
    %477 = vmatprep.mubr.f32.mxu0 0.0
    %478 = vmatmul.mubr.f32.gmra.mrb[0].mxu0 %v409
    %v479 = vpop.f32.mrb[0].mxu0
    %v480 = vadd.f32 0.0, %v479
    %v481 = vpop.f32.mrb[0].mxu0
    %482 = vdwg.mxu0
    %v483 = vsel %vm408, %v193, 0
    %v485 = vsel %vm408, %v278, 0
    %487 = vmatprep.subr.mxu0 0.0
    %488 = vmatpush1.xpose.msra.mxu0 %v485
    %489 = vmatprep.subr.mxu0 0.0
    %490 = vmatpush1.xpose.msra.mxu0 0.0
    %491 = vmatprep.subr.mxu0 0.0
    %492 = vmatpush1.xpose.msra.mxu0 0.0
    %493 = vmatprep.subr.mxu0 0.0
    %494 = vmatpush1.xpose.msra.mxu0 0.0
    %495 = vmatprep.subr.mxu0 0.0
    %496 = vmatpush1.xpose.msra.mxu0 0.0
    %497 = vmatprep.subr.mxu0 0.0
    %498 = vmatpush1.xpose.msra.mxu0 0.0
    %499 = vmatprep.subr.mxu0 0.0
    %500 = vmatpush1.xpose.msra.mxu0 0.0
    %501 = vmatprep.subr.mxu0 0.0
    %502 = vmatpush1.xpose.msra.mxu0 0.0
    %503 = vmatprep.subr.mxu0 0.0
    %504 = vmatpush1.xpose.msra.mxu0 0.0
    %505 = vmatprep.subr.mxu0 0.0
    %506 = vmatpush1.xpose.msra.mxu0 0.0
    %507 = vmatprep.subr.mxu0 0.0
    %508 = vmatpush1.xpose.msra.mxu0 0.0
    %509 = vmatprep.subr.mxu0 0.0
    %510 = vmatpush1.xpose.msra.mxu0 0.0
    %511 = vmatprep.subr.mxu0 0.0
    %512 = vmatpush1.xpose.msra.mxu0 0.0
    %513 = vmatprep.subr.mxu0 0.0
    %514 = vmatpush1.xpose.msra.mxu0 0.0
    %515 = vmatprep.subr.mxu0 0.0
    %516 = vmatpush1.xpose.msra.mxu0 0.0
    %517 = vmatprep.subr.mxu0 0.0
    %518 = vmatpush1.xpose.msra.mxu0 0.0
    %519 = vmatprep.subr.mxu0 0.0
    %520 = vmatpush1.xpose.msra.mxu0 0.0
    %521 = vmatprep.subr.mxu0 0.0
    %522 = vmatpush1.xpose.msra.mxu0 0.0
    %523 = vmatprep.subr.mxu0 0.0
    %524 = vmatpush1.xpose.msra.mxu0 0.0
    %525 = vmatprep.subr.mxu0 0.0
    %526 = vmatpush1.xpose.msra.mxu0 0.0
    %527 = vmatprep.subr.mxu0 0.0
    %528 = vmatpush1.xpose.msra.mxu0 0.0
    %529 = vmatprep.subr.mxu0 0.0
    %530 = vmatpush1.xpose.msra.mxu0 0.0
    %531 = vmatprep.subr.mxu0 0.0
    %532 = vmatpush1.xpose.msra.mxu0 0.0
    %533 = vmatprep.subr.mxu0 0.0
    %534 = vmatpush1.xpose.msra.mxu0 0.0
    %535 = vmatprep.subr.mxu0 0.0
    %536 = vmatpush1.xpose.msra.mxu0 0.0
    %537 = vmatprep.subr.mxu0 0.0
    %538 = vmatpush1.xpose.msra.mxu0 0.0
    %539 = vmatprep.subr.mxu0 0.0
    %540 = vmatpush1.xpose.msra.mxu0 0.0
    %541 = vmatprep.subr.mxu0 0.0
    %542 = vmatpush1.xpose.msra.mxu0 0.0
    %543 = vmatprep.subr.mxu0 0.0
    %544 = vmatpush1.xpose.msra.mxu0 0.0
    %545 = vmatprep.subr.mxu0 0.0
    %546 = vmatpush1.xpose.msra.mxu0 0.0
    %547 = vmatprep.subr.mxu0 0.0
    %548 = vmatpush1.xpose.msra.mxu0 0.0
    %549 = vmatprep.subr.mxu0 0.0
    %550 = vmatpush1.xpose.msra.mxu0 0.0
    %551 = vmatprep.mubr.f32.mxu0 0.0
    %552 = vmatmul.mubr.f32.gmra.mrb[0].mxu0 %v483
    %v553 = vpop.f32.mrb[0].mxu0
    %v554 = vadd.f32 0.0, %v553
    %v555 = vpop.f32.mrb[0].mxu0
    %556 = vdwg.mxu0
    %v557 = vsel %vm408, %v363, 0
    %v559 = vsel %vm408, %v377, 0
    %561 = vmatprep.subr.mxu0 0.0
    %562 = vmatpush1.xpose.msra.mxu0 %v559
    %563 = vmatprep.subr.mxu0 0.0
    %564 = vmatpush1.xpose.msra.mxu0 0.0
    %565 = vmatprep.subr.mxu0 0.0
    %566 = vmatpush1.xpose.msra.mxu0 0.0
    %567 = vmatprep.subr.mxu0 0.0
    %568 = vmatpush1.xpose.msra.mxu0 0.0
    %569 = vmatprep.subr.mxu0 0.0
    %570 = vmatpush1.xpose.msra.mxu0 0.0
    %571 = vmatprep.subr.mxu0 0.0
    %572 = vmatpush1.xpose.msra.mxu0 0.0
    %573 = vmatprep.subr.mxu0 0.0
    %574 = vmatpush1.xpose.msra.mxu0 0.0
    %575 = vmatprep.subr.mxu0 0.0
    %576 = vmatpush1.xpose.msra.mxu0 0.0
    %577 = vmatprep.subr.mxu0 0.0
    %578 = vmatpush1.xpose.msra.mxu0 0.0
    %579 = vmatprep.subr.mxu0 0.0
    %580 = vmatpush1.xpose.msra.mxu0 0.0
    %581 = vmatprep.subr.mxu0 0.0
    %582 = vmatpush1.xpose.msra.mxu0 0.0
    %583 = vmatprep.subr.mxu0 0.0
    %584 = vmatpush1.xpose.msra.mxu0 0.0
    %585 = vmatprep.subr.mxu0 0.0
    %586 = vmatpush1.xpose.msra.mxu0 0.0
    %587 = vmatprep.subr.mxu0 0.0
    %588 = vmatpush1.xpose.msra.mxu0 0.0
    %589 = vmatprep.subr.mxu0 0.0
    %590 = vmatpush1.xpose.msra.mxu0 0.0
    %591 = vmatprep.subr.mxu0 0.0
    %592 = vmatpush1.xpose.msra.mxu0 0.0
    %593 = vmatprep.subr.mxu0 0.0
    %594 = vmatpush1.xpose.msra.mxu0 0.0
    %595 = vmatprep.subr.mxu0 0.0
    %596 = vmatpush1.xpose.msra.mxu0 0.0
    %597 = vmatprep.subr.mxu0 0.0
    %598 = vmatpush1.xpose.msra.mxu0 0.0
    %599 = vmatprep.subr.mxu0 0.0
    %600 = vmatpush1.xpose.msra.mxu0 0.0
    %601 = vmatprep.subr.mxu0 0.0
    %602 = vmatpush1.xpose.msra.mxu0 0.0
    %603 = vmatprep.subr.mxu0 0.0
    %604 = vmatpush1.xpose.msra.mxu0 0.0
    %605 = vmatprep.subr.mxu0 0.0
    %606 = vmatpush1.xpose.msra.mxu0 0.0
    %607 = vmatprep.subr.mxu0 0.0
    %608 = vmatpush1.xpose.msra.mxu0 0.0
    %609 = vmatprep.subr.mxu0 0.0
    %610 = vmatpush1.xpose.msra.mxu0 0.0
    %611 = vmatprep.subr.mxu0 0.0
    %612 = vmatpush1.xpose.msra.mxu0 0.0
    %613 = vmatprep.subr.mxu0 0.0
    %614 = vmatpush1.xpose.msra.mxu0 0.0
    %615 = vmatprep.subr.mxu0 0.0
    %616 = vmatpush1.xpose.msra.mxu0 0.0
    %617 = vmatprep.subr.mxu0 0.0
    %618 = vmatpush1.xpose.msra.mxu0 0.0
    %619 = vmatprep.subr.mxu0 0.0
    %620 = vmatpush1.xpose.msra.mxu0 0.0
    %621 = vmatprep.subr.mxu0 0.0
    %622 = vmatpush1.xpose.msra.mxu0 0.0
    %623 = vmatprep.subr.mxu0 0.0
    %624 = vmatpush1.xpose.msra.mxu0 0.0
    %625 = vmatprep.mubr.f32.mxu0 0.0
    %626 = vmatmul.mubr.f32.gmra.mrb[0].mxu0 %v557
    %v627 = vpop.f32.mrb[0].mxu0
    %v628 = vadd.f32 0.0, %v627
    %v629 = vpop.f32.mrb[0].mxu0
    %630 = vdwg.mxu0
    %v631 = vsel %vm408, %v365, 0
    %v633 = vsel %vm408, %v379, 0
    %635 = vmatprep.subr.mxu0 0.0
    %636 = vmatpush1.xpose.msra.mxu0 %v633
    %637 = vmatprep.subr.mxu0 0.0
    %638 = vmatpush1.xpose.msra.mxu0 0.0
    %639 = vmatprep.subr.mxu0 0.0
    %640 = vmatpush1.xpose.msra.mxu0 0.0
    %641 = vmatprep.subr.mxu0 0.0
    %642 = vmatpush1.xpose.msra.mxu0 0.0
    %643 = vmatprep.subr.mxu0 0.0
    %644 = vmatpush1.xpose.msra.mxu0 0.0
    %645 = vmatprep.subr.mxu0 0.0
    %646 = vmatpush1.xpose.msra.mxu0 0.0
    %647 = vmatprep.subr.mxu0 0.0
    %648 = vmatpush1.xpose.msra.mxu0 0.0
    %649 = vmatprep.subr.mxu0 0.0
    %650 = vmatpush1.xpose.msra.mxu0 0.0
    %651 = vmatprep.subr.mxu0 0.0
    %652 = vmatpush1.xpose.msra.mxu0 0.0
    %653 = vmatprep.subr.mxu0 0.0
    %654 = vmatpush1.xpose.msra.mxu0 0.0
    %655 = vmatprep.subr.mxu0 0.0
    %656 = vmatpush1.xpose.msra.mxu0 0.0
    %657 = vmatprep.subr.mxu0 0.0
    %658 = vmatpush1.xpose.msra.mxu0 0.0
    %659 = vmatprep.subr.mxu0 0.0
    %660 = vmatpush1.xpose.msra.mxu0 0.0
    %661 = vmatprep.subr.mxu0 0.0
    %662 = vmatpush1.xpose.msra.mxu0 0.0
    %663 = vmatprep.subr.mxu0 0.0
    %664 = vmatpush1.xpose.msra.mxu0 0.0
    %665 = vmatprep.subr.mxu0 0.0
    %666 = vmatpush1.xpose.msra.mxu0 0.0
    %667 = vmatprep.subr.mxu0 0.0
    %668 = vmatpush1.xpose.msra.mxu0 0.0
    %669 = vmatprep.subr.mxu0 0.0
    %670 = vmatpush1.xpose.msra.mxu0 0.0
    %671 = vmatprep.subr.mxu0 0.0
    %672 = vmatpush1.xpose.msra.mxu0 0.0
    %673 = vmatprep.subr.mxu0 0.0
    %674 = vmatpush1.xpose.msra.mxu0 0.0
    %675 = vmatprep.subr.mxu0 0.0
    %676 = vmatpush1.xpose.msra.mxu0 0.0
    %677 = vmatprep.subr.mxu0 0.0
    %678 = vmatpush1.xpose.msra.mxu0 0.0
    %679 = vmatprep.subr.mxu0 0.0
    %680 = vmatpush1.xpose.msra.mxu0 0.0
    %681 = vmatprep.subr.mxu0 0.0
    %682 = vmatpush1.xpose.msra.mxu0 0.0
    %683 = vmatprep.subr.mxu0 0.0
    %684 = vmatpush1.xpose.msra.mxu0 0.0
    %685 = vmatprep.subr.mxu0 0.0
    %686 = vmatpush1.xpose.msra.mxu0 0.0
    %687 = vmatprep.subr.mxu0 0.0
    %688 = vmatpush1.xpose.msra.mxu0 0.0
    %689 = vmatprep.subr.mxu0 0.0
    %690 = vmatpush1.xpose.msra.mxu0 0.0
    %691 = vmatprep.subr.mxu0 0.0
    %692 = vmatpush1.xpose.msra.mxu0 0.0
    %693 = vmatprep.subr.mxu0 0.0
    %694 = vmatpush1.xpose.msra.mxu0 0.0
    %695 = vmatprep.subr.mxu0 0.0
    %696 = vmatpush1.xpose.msra.mxu0 0.0
    %697 = vmatprep.subr.mxu0 0.0
    %698 = vmatpush1.xpose.msra.mxu0 0.0
    %699 = vmatprep.mubr.f32.mxu0 0.0
    %700 = vmatmul.mubr.f32.gmra.mrb[0].mxu0 %v631
    %v701 = vpop.f32.mrb[0].mxu0
    %v702 = vadd.f32 0.0, %v701
    %v703 = vpop.f32.mrb[0].mxu0
    %704 = vdwg.mxu0
    %v705 = vsel %vm408, %v367, 0
    %v707 = vsel %vm408, %v381, 0
    %709 = vmatprep.subr.mxu0 0.0
    %710 = vmatpush1.xpose.msra.mxu0 %v707
    %711 = vmatprep.subr.mxu0 0.0
    %712 = vmatpush1.xpose.msra.mxu0 0.0
    %713 = vmatprep.subr.mxu0 0.0
    %714 = vmatpush1.xpose.msra.mxu0 0.0
    %715 = vmatprep.subr.mxu0 0.0
    %716 = vmatpush1.xpose.msra.mxu0 0.0
    %717 = vmatprep.subr.mxu0 0.0
    %718 = vmatpush1.xpose.msra.mxu0 0.0
    %719 = vmatprep.subr.mxu0 0.0
    %720 = vmatpush1.xpose.msra.mxu0 0.0
    %721 = vmatprep.subr.mxu0 0.0
    %722 = vmatpush1.xpose.msra.mxu0 0.0
    %723 = vmatprep.subr.mxu0 0.0
    %724 = vmatpush1.xpose.msra.mxu0 0.0
    %725 = vmatprep.subr.mxu0 0.0
    %726 = vmatpush1.xpose.msra.mxu0 0.0
    %727 = vmatprep.subr.mxu0 0.0
    %728 = vmatpush1.xpose.msra.mxu0 0.0
    %729 = vmatprep.subr.mxu0 0.0
    %730 = vmatpush1.xpose.msra.mxu0 0.0
    %731 = vmatprep.subr.mxu0 0.0
    %732 = vmatpush1.xpose.msra.mxu0 0.0
    %733 = vmatprep.subr.mxu0 0.0
    %734 = vmatpush1.xpose.msra.mxu0 0.0
    %735 = vmatprep.subr.mxu0 0.0
    %736 = vmatpush1.xpose.msra.mxu0 0.0
    %737 = vmatprep.subr.mxu0 0.0
    %738 = vmatpush1.xpose.msra.mxu0 0.0
    %739 = vmatprep.subr.mxu0 0.0
    %740 = vmatpush1.xpose.msra.mxu0 0.0
    %741 = vmatprep.subr.mxu0 0.0
    %742 = vmatpush1.xpose.msra.mxu0 0.0
    %743 = vmatprep.subr.mxu0 0.0
    %744 = vmatpush1.xpose.msra.mxu0 0.0
    %745 = vmatprep.subr.mxu0 0.0
    %746 = vmatpush1.xpose.msra.mxu0 0.0
    %747 = vmatprep.subr.mxu0 0.0
    %748 = vmatpush1.xpose.msra.mxu0 0.0
    %749 = vmatprep.subr.mxu0 0.0
    %750 = vmatpush1.xpose.msra.mxu0 0.0
    %751 = vmatprep.subr.mxu0 0.0
    %752 = vmatpush1.xpose.msra.mxu0 0.0
    %753 = vmatprep.subr.mxu0 0.0
    %754 = vmatpush1.xpose.msra.mxu0 0.0
    %755 = vmatprep.subr.mxu0 0.0
    %756 = vmatpush1.xpose.msra.mxu0 0.0
    %757 = vmatprep.subr.mxu0 0.0
    %758 = vmatpush1.xpose.msra.mxu0 0.0
    %759 = vmatprep.subr.mxu0 0.0
    %760 = vmatpush1.xpose.msra.mxu0 0.0
    %761 = vmatprep.subr.mxu0 0.0
    %762 = vmatpush1.xpose.msra.mxu0 0.0
    %763 = vmatprep.subr.mxu0 0.0
    %764 = vmatpush1.xpose.msra.mxu0 0.0
    %765 = vmatprep.subr.mxu0 0.0
    %766 = vmatpush1.xpose.msra.mxu0 0.0
    %767 = vmatprep.subr.mxu0 0.0
    %768 = vmatpush1.xpose.msra.mxu0 0.0
    %769 = vmatprep.subr.mxu0 0.0
    %770 = vmatpush1.xpose.msra.mxu0 0.0
    %771 = vmatprep.subr.mxu0 0.0
    %772 = vmatpush1.xpose.msra.mxu0 0.0
    %773 = vmatprep.mubr.f32.mxu0 0.0
    %774 = vmatmul.mubr.f32.gmra.mrb[0].mxu0 %v705
    %v775 = vpop.f32.mrb[0].mxu0
    %v776 = vadd.f32 0.0, %v775
    %v777 = vpop.f32.mrb[0].mxu0
    %778 = vdwg.mxu0
    %v779 = vsel %vm408, %v369, 0
    %v781 = vsel %vm408, %v383, 0
    %783 = vmatprep.subr.mxu0 0.0
    %784 = vmatpush1.xpose.msra.mxu0 %v781
    %785 = vmatprep.subr.mxu0 0.0
    %786 = vmatpush1.xpose.msra.mxu0 0.0
    %787 = vmatprep.subr.mxu0 0.0
    %788 = vmatpush1.xpose.msra.mxu0 0.0
    %789 = vmatprep.subr.mxu0 0.0
    %790 = vmatpush1.xpose.msra.mxu0 0.0
    %791 = vmatprep.subr.mxu0 0.0
    %792 = vmatpush1.xpose.msra.mxu0 0.0
    %793 = vmatprep.subr.mxu0 0.0
    %794 = vmatpush1.xpose.msra.mxu0 0.0
    %795 = vmatprep.subr.mxu0 0.0
    %796 = vmatpush1.xpose.msra.mxu0 0.0
    %797 = vmatprep.subr.mxu0 0.0
    %798 = vmatpush1.xpose.msra.mxu0 0.0
    %799 = vmatprep.subr.mxu0 0.0
    %800 = vmatpush1.xpose.msra.mxu0 0.0
    %801 = vmatprep.subr.mxu0 0.0
    %802 = vmatpush1.xpose.msra.mxu0 0.0
    %803 = vmatprep.subr.mxu0 0.0
    %804 = vmatpush1.xpose.msra.mxu0 0.0
    %805 = vmatprep.subr.mxu0 0.0
    %806 = vmatpush1.xpose.msra.mxu0 0.0
    %807 = vmatprep.subr.mxu0 0.0
    %808 = vmatpush1.xpose.msra.mxu0 0.0
    %809 = vmatprep.subr.mxu0 0.0
    %810 = vmatpush1.xpose.msra.mxu0 0.0
    %811 = vmatprep.subr.mxu0 0.0
    %812 = vmatpush1.xpose.msra.mxu0 0.0
    %813 = vmatprep.subr.mxu0 0.0
    %814 = vmatpush1.xpose.msra.mxu0 0.0
    %815 = vmatprep.subr.mxu0 0.0
    %816 = vmatpush1.xpose.msra.mxu0 0.0
    %817 = vmatprep.subr.mxu0 0.0
    %818 = vmatpush1.xpose.msra.mxu0 0.0
    %819 = vmatprep.subr.mxu0 0.0
    %820 = vmatpush1.xpose.msra.mxu0 0.0
    %821 = vmatprep.subr.mxu0 0.0
    %822 = vmatpush1.xpose.msra.mxu0 0.0
    %823 = vmatprep.subr.mxu0 0.0
    %824 = vmatpush1.xpose.msra.mxu0 0.0
    %825 = vmatprep.subr.mxu0 0.0
    %826 = vmatpush1.xpose.msra.mxu0 0.0
    %827 = vmatprep.subr.mxu0 0.0
    %828 = vmatpush1.xpose.msra.mxu0 0.0
    %829 = vmatprep.subr.mxu0 0.0
    %830 = vmatpush1.xpose.msra.mxu0 0.0
    %831 = vmatprep.subr.mxu0 0.0
    %832 = vmatpush1.xpose.msra.mxu0 0.0
    %833 = vmatprep.subr.mxu0 0.0
    %834 = vmatpush1.xpose.msra.mxu0 0.0
    %835 = vmatprep.subr.mxu0 0.0
    %836 = vmatpush1.xpose.msra.mxu0 0.0
    %837 = vmatprep.subr.mxu0 0.0
    %838 = vmatpush1.xpose.msra.mxu0 0.0
    %839 = vmatprep.subr.mxu0 0.0
    %840 = vmatpush1.xpose.msra.mxu0 0.0
    %841 = vmatprep.subr.mxu0 0.0
    %842 = vmatpush1.xpose.msra.mxu0 0.0
    %843 = vmatprep.subr.mxu0 0.0
    %844 = vmatpush1.xpose.msra.mxu0 0.0
    %845 = vmatprep.subr.mxu0 0.0
    %846 = vmatpush1.xpose.msra.mxu0 0.0
    %847 = vmatprep.mubr.f32.mxu0 0.0
    %848 = vmatmul.mubr.f32.gmra.mrb[0].mxu0 %v779
    %v849 = vpop.f32.mrb[0].mxu0
    %v850 = vadd.f32 0.0, %v849
    %v851 = vpop.f32.mrb[0].mxu0
    %852 = vdwg.mxu0
    %v853 = vsel %vm408, %v371, 0
    %v855 = vsel %vm408, %v385, 0
    %857 = vmatprep.subr.mxu0 0.0
    %858 = vmatpush1.xpose.msra.mxu0 %v855
    %859 = vmatprep.subr.mxu0 0.0
    %860 = vmatpush1.xpose.msra.mxu0 0.0
    %861 = vmatprep.subr.mxu0 0.0
    %862 = vmatpush1.xpose.msra.mxu0 0.0
    %863 = vmatprep.subr.mxu0 0.0
    %864 = vmatpush1.xpose.msra.mxu0 0.0
    %865 = vmatprep.subr.mxu0 0.0
    %866 = vmatpush1.xpose.msra.mxu0 0.0
    %867 = vmatprep.subr.mxu0 0.0
    %868 = vmatpush1.xpose.msra.mxu0 0.0
    %869 = vmatprep.subr.mxu0 0.0
    %870 = vmatpush1.xpose.msra.mxu0 0.0
    %871 = vmatprep.subr.mxu0 0.0
    %872 = vmatpush1.xpose.msra.mxu0 0.0
    %873 = vmatprep.subr.mxu0 0.0
    %874 = vmatpush1.xpose.msra.mxu0 0.0
    %875 = vmatprep.subr.mxu0 0.0
    %876 = vmatpush1.xpose.msra.mxu0 0.0
    %877 = vmatprep.subr.mxu0 0.0
    %878 = vmatpush1.xpose.msra.mxu0 0.0
    %879 = vmatprep.subr.mxu0 0.0
    %880 = vmatpush1.xpose.msra.mxu0 0.0
    %881 = vmatprep.subr.mxu0 0.0
    %882 = vmatpush1.xpose.msra.mxu0 0.0
    %883 = vmatprep.subr.mxu0 0.0
    %884 = vmatpush1.xpose.msra.mxu0 0.0
    %885 = vmatprep.subr.mxu0 0.0
    %886 = vmatpush1.xpose.msra.mxu0 0.0
    %887 = vmatprep.subr.mxu0 0.0
    %888 = vmatpush1.xpose.msra.mxu0 0.0
    %889 = vmatprep.subr.mxu0 0.0
    %890 = vmatpush1.xpose.msra.mxu0 0.0
    %891 = vmatprep.subr.mxu0 0.0
    %892 = vmatpush1.xpose.msra.mxu0 0.0
    %893 = vmatprep.subr.mxu0 0.0
    %894 = vmatpush1.xpose.msra.mxu0 0.0
    %895 = vmatprep.subr.mxu0 0.0
    %896 = vmatpush1.xpose.msra.mxu0 0.0
    %897 = vmatprep.subr.mxu0 0.0
    %898 = vmatpush1.xpose.msra.mxu0 0.0
    %899 = vmatprep.subr.mxu0 0.0
    %900 = vmatpush1.xpose.msra.mxu0 0.0
    %901 = vmatprep.subr.mxu0 0.0
    %902 = vmatpush1.xpose.msra.mxu0 0.0
    %903 = vmatprep.subr.mxu0 0.0
    %904 = vmatpush1.xpose.msra.mxu0 0.0
    %905 = vmatprep.subr.mxu0 0.0
    %906 = vmatpush1.xpose.msra.mxu0 0.0
    %907 = vmatprep.subr.mxu0 0.0
    %908 = vmatpush1.xpose.msra.mxu0 0.0
    %909 = vmatprep.subr.mxu0 0.0
    %910 = vmatpush1.xpose.msra.mxu0 0.0
    %911 = vmatprep.subr.mxu0 0.0
    %912 = vmatpush1.xpose.msra.mxu0 0.0
    %913 = vmatprep.subr.mxu0 0.0
    %914 = vmatpush1.xpose.msra.mxu0 0.0
    %915 = vmatprep.subr.mxu0 0.0
    %916 = vmatpush1.xpose.msra.mxu0 0.0
    %917 = vmatprep.subr.mxu0 0.0
    %918 = vmatpush1.xpose.msra.mxu0 0.0
    %919 = vmatprep.subr.mxu0 0.0
    %920 = vmatpush1.xpose.msra.mxu0 0.0
    %921 = vmatprep.mubr.f32.mxu0 0.0
    %922 = vmatmul.mubr.f32.gmra.mrb[0].mxu0 %v853
    %v923 = vpop.f32.mrb[0].mxu0
    %v924 = vadd.f32 0.0, %v923
    %v925 = vpop.f32.mrb[0].mxu0
    %926 = vdwg.mxu0
    %v927 = vsel %vm408, %v373, 0
    %v929 = vsel %vm408, %v387, 0
    %931 = vmatprep.subr.mxu0 0.0
    %932 = vmatpush1.xpose.msra.mxu0 %v929
    %933 = vmatprep.subr.mxu0 0.0
    %934 = vmatpush1.xpose.msra.mxu0 0.0
    %935 = vmatprep.subr.mxu0 0.0
    %936 = vmatpush1.xpose.msra.mxu0 0.0
    %937 = vmatprep.subr.mxu0 0.0
    %938 = vmatpush1.xpose.msra.mxu0 0.0
    %939 = vmatprep.subr.mxu0 0.0
    %940 = vmatpush1.xpose.msra.mxu0 0.0
    %941 = vmatprep.subr.mxu0 0.0
    %942 = vmatpush1.xpose.msra.mxu0 0.0
    %943 = vmatprep.subr.mxu0 0.0
    %944 = vmatpush1.xpose.msra.mxu0 0.0
    %945 = vmatprep.subr.mxu0 0.0
    %946 = vmatpush1.xpose.msra.mxu0 0.0
    %947 = vmatprep.subr.mxu0 0.0
    %948 = vmatpush1.xpose.msra.mxu0 0.0
    %949 = vmatprep.subr.mxu0 0.0
    %950 = vmatpush1.xpose.msra.mxu0 0.0
    %951 = vmatprep.subr.mxu0 0.0
    %952 = vmatpush1.xpose.msra.mxu0 0.0
    %953 = vmatprep.subr.mxu0 0.0
    %954 = vmatpush1.xpose.msra.mxu0 0.0
    %955 = vmatprep.subr.mxu0 0.0
    %956 = vmatpush1.xpose.msra.mxu0 0.0
    %957 = vmatprep.subr.mxu0 0.0
    %958 = vmatpush1.xpose.msra.mxu0 0.0
    %959 = vmatprep.subr.mxu0 0.0
    %960 = vmatpush1.xpose.msra.mxu0 0.0
    %961 = vmatprep.subr.mxu0 0.0
    %962 = vmatpush1.xpose.msra.mxu0 0.0
    %963 = vmatprep.subr.mxu0 0.0
    %964 = vmatpush1.xpose.msra.mxu0 0.0
    %965 = vmatprep.subr.mxu0 0.0
    %966 = vmatpush1.xpose.msra.mxu0 0.0
    %967 = vmatprep.subr.mxu0 0.0
    %968 = vmatpush1.xpose.msra.mxu0 0.0
    %969 = vmatprep.subr.mxu0 0.0
    %970 = vmatpush1.xpose.msra.mxu0 0.0
    %971 = vmatprep.subr.mxu0 0.0
    %972 = vmatpush1.xpose.msra.mxu0 0.0
    %973 = vmatprep.subr.mxu0 0.0
    %974 = vmatpush1.xpose.msra.mxu0 0.0
    %975 = vmatprep.subr.mxu0 0.0
    %976 = vmatpush1.xpose.msra.mxu0 0.0
    %977 = vmatprep.subr.mxu0 0.0
    %978 = vmatpush1.xpose.msra.mxu0 0.0
    %979 = vmatprep.subr.mxu0 0.0
    %980 = vmatpush1.xpose.msra.mxu0 0.0
    %981 = vmatprep.subr.mxu0 0.0
    %982 = vmatpush1.xpose.msra.mxu0 0.0
    %983 = vmatprep.subr.mxu0 0.0
    %984 = vmatpush1.xpose.msra.mxu0 0.0
    %985 = vmatprep.subr.mxu0 0.0
    %986 = vmatpush1.xpose.msra.mxu0 0.0
    %987 = vmatprep.subr.mxu0 0.0
    %988 = vmatpush1.xpose.msra.mxu0 0.0
    %989 = vmatprep.subr.mxu0 0.0
    %990 = vmatpush1.xpose.msra.mxu0 0.0
    %991 = vmatprep.subr.mxu0 0.0
    %992 = vmatpush1.xpose.msra.mxu0 0.0
    %993 = vmatprep.subr.mxu0 0.0
    %994 = vmatpush1.xpose.msra.mxu0 0.0
    %995 = vmatprep.mubr.f32.mxu0 0.0
    %996 = vmatmul.mubr.f32.gmra.mrb[0].mxu0 %v927
    %v997 = vpop.f32.mrb[0].mxu0
    %v998 = vadd.f32 0.0, %v997
    %v999 = vpop.f32.mrb[0].mxu0
    %1000 = vdwg.mxu0
    %v1001 = vsel %vm408, %v480, -inf
    %1002 = vmax.xlane.f32.xlu0 %v1001
    %v1003 = vpop.xlane.xlu0 %1002
    %v1004 = vsel %vm408, %v554, -inf
    %1005 = vmax.xlane.f32.xlu0 %v1004
    %v1006 = vpop.xlane.xlu0 %1005
    %v1007 = vsel %vm408, %v628, -inf
    %1008 = vmax.xlane.f32.xlu0 %v1007
    %v1009 = vpop.xlane.xlu0 %1008
    %v1010 = vsel %vm408, %v702, -inf
    %1011 = vmax.xlane.f32.xlu0 %v1010
    %v1012 = vpop.xlane.xlu0 %1011
    %v1013 = vsel %vm408, %v776, -inf
    %1014 = vmax.xlane.f32.xlu0 %v1013
    %v1015 = vpop.xlane.xlu0 %1014
    %v1016 = vsel %vm408, %v850, -inf
    %1017 = vmax.xlane.f32.xlu0 %v1016
    %v1018 = vpop.xlane.xlu0 %1017
    %v1019 = vsel %vm408, %v924, -inf
    %1020 = vmax.xlane.f32.xlu0 %v1019
    %v1021 = vpop.xlane.xlu0 %1020
    %v1022 = vsel %vm408, %v998, -inf
    %1023 = vmax.xlane.f32.xlu0 %v1022
    %v1024 = vpop.xlane.xlu0 %1023
    %v1025 = vsub.f32 %v480, %v1003
    %v1026 = vsub.f32 %v554, %v1006
    %v1027 = vsub.f32 %v628, %v1009
    %v1028 = vsub.f32 %v702, %v1012
    %v1029 = vsub.f32 %v776, %v1015
    %v1030 = vsub.f32 %v850, %v1018
    %v1031 = vsub.f32 %v924, %v1021
    %v1032 = vsub.f32 %v998, %v1024
    %v1033 = vmul.f32 %v1025, 1.442695
    %v1034 = vpow.pop %v1033
    %v1035 = vmul.f32 %v1026, 1.442695
    %v1036 = vpow.pop %v1035
    %v1037 = vmul.f32 %v1027, 1.442695
    %v1038 = vpow.pop %v1037
    %v1039 = vmul.f32 %v1028, 1.442695
    %v1040 = vpow.pop %v1039
    %v1041 = vmul.f32 %v1029, 1.442695
    %v1042 = vpow.pop %v1041
    %v1043 = vmul.f32 %v1030, 1.442695
    %v1044 = vpow.pop %v1043
    %v1045 = vmul.f32 %v1031, 1.442695
    %v1046 = vpow.pop %v1045
    %v1047 = vmul.f32 %v1032, 1.442695
    %v1048 = vpow.pop %v1047
    %v1049 = vsel %vm408, %v1034, 0.0
    %1050 = vadd.xlane.f32.xlu0 %v1049
    %v1051 = vpop.xlane.xlu0 %1050
    %v1052 = vsel %vm408, %v1036, 0.0
    %1053 = vadd.xlane.f32.xlu0 %v1052
    %v1054 = vpop.xlane.xlu0 %1053
    %v1055 = vsel %vm408, %v1038, 0.0
    %1056 = vadd.xlane.f32.xlu0 %v1055
    %v1057 = vpop.xlane.xlu0 %1056
    %v1058 = vsel %vm408, %v1040, 0.0
    %1059 = vadd.xlane.f32.xlu0 %v1058
    %v1060 = vpop.xlane.xlu0 %1059
    %v1061 = vsel %vm408, %v1042, 0.0
    %1062 = vadd.xlane.f32.xlu0 %v1061
    %v1063 = vpop.xlane.xlu0 %1062
    %v1064 = vsel %vm408, %v1044, 0.0
    %1065 = vadd.xlane.f32.xlu0 %v1064
    %v1066 = vpop.xlane.xlu0 %1065
    %v1067 = vsel %vm408, %v1046, 0.0
    %1068 = vadd.xlane.f32.xlu0 %v1067
    %v1069 = vpop.xlane.xlu0 %1068
    %v1070 = vsel %vm408, %v1048, 0.0
    %1071 = vadd.xlane.f32.xlu0 %v1070
    %v1072 = vpop.xlane.xlu0 %1071
    %v1073 = vrcp.pop %v1051
    %v1074 = vrcp.pop %v1054
    %v1075 = vrcp.pop %v1057
    %v1076 = vrcp.pop %v1060
    %v1077 = vrcp.pop %v1063
    %v1078 = vrcp.pop %v1066
    %v1079 = vrcp.pop %v1069
    %v1080 = vrcp.pop %v1072
    %v1081 = vmul.f32 %v1034, %v1073
    %v1082 = vmul.f32 %v1036, %v1074
    %v1083 = vmul.f32 %v1038, %v1075
    %v1084 = vmul.f32 %v1040, %v1076
    %v1085 = vmul.f32 %v1042, %v1077
    %v1086 = vmul.f32 %v1044, %v1078
    %v1087 = vmul.f32 %v1046, %v1079
    %v1088 = vmul.f32 %v1048, %v1080
    %v1090 = vsel %vm408, %v1081, 0
    %1092 = vmatprep.subr.mxu0 0.0
    %1093 = vmatpush1.msra.mxu0 %v352
    %1094 = vmatprep.subr.mxu0 0.0
    %1095 = vmatpush1.msra.mxu0 0.0
    %1096 = vmatprep.subr.mxu0 0.0
    %1097 = vmatpush1.msra.mxu0 0.0
    %1098 = vmatprep.subr.mxu0 0.0
    %1099 = vmatpush1.msra.mxu0 0.0
    %1100 = vmatprep.subr.mxu0 0.0
    %1101 = vmatpush1.msra.mxu0 0.0
    %1102 = vmatprep.subr.mxu0 0.0
    %1103 = vmatpush1.msra.mxu0 0.0
    %1104 = vmatprep.subr.mxu0 0.0
    %1105 = vmatpush1.msra.mxu0 0.0
    %1106 = vmatprep.subr.mxu0 0.0
    %1107 = vmatpush1.msra.mxu0 0.0
    %1108 = vmatprep.subr.mxu0 0.0
    %1109 = vmatpush1.msra.mxu0 0.0
    %1110 = vmatprep.subr.mxu0 0.0
    %1111 = vmatpush1.msra.mxu0 0.0
    %1112 = vmatprep.subr.mxu0 0.0
    %1113 = vmatpush1.msra.mxu0 0.0
    %1114 = vmatprep.subr.mxu0 0.0
    %1115 = vmatpush1.msra.mxu0 0.0
    %1116 = vmatprep.subr.mxu0 0.0
    %1117 = vmatpush1.msra.mxu0 0.0
    %1118 = vmatprep.subr.mxu0 0.0
    %1119 = vmatpush1.msra.mxu0 0.0
    %1120 = vmatprep.subr.mxu0 0.0
    %1121 = vmatpush1.msra.mxu0 0.0
    %1122 = vmatprep.subr.mxu0 0.0
    %1123 = vmatpush1.msra.mxu0 0.0
    %1124 = vmatprep.subr.mxu0 0.0
    %1125 = vmatpush1.msra.mxu0 0.0
    %1126 = vmatprep.subr.mxu0 0.0
    %1127 = vmatpush1.msra.mxu0 0.0
    %1128 = vmatprep.subr.mxu0 0.0
    %1129 = vmatpush1.msra.mxu0 0.0
    %1130 = vmatprep.subr.mxu0 0.0
    %1131 = vmatpush1.msra.mxu0 0.0
    %1132 = vmatprep.subr.mxu0 0.0
    %1133 = vmatpush1.msra.mxu0 0.0
    %1134 = vmatprep.subr.mxu0 0.0
    %1135 = vmatpush1.msra.mxu0 0.0
    %1136 = vmatprep.subr.mxu0 0.0
    %1137 = vmatpush1.msra.mxu0 0.0
    %1138 = vmatprep.subr.mxu0 0.0
    %1139 = vmatpush1.msra.mxu0 0.0
    %1140 = vmatprep.subr.mxu0 0.0
    %1141 = vmatpush1.msra.mxu0 0.0
    %1142 = vmatprep.subr.mxu0 0.0
    %1143 = vmatpush1.msra.mxu0 0.0
    %1144 = vmatprep.subr.mxu0 0.0
    %1145 = vmatpush1.msra.mxu0 0.0
    %1146 = vmatprep.subr.mxu0 0.0
    %1147 = vmatpush1.msra.mxu0 0.0
    %1148 = vmatprep.subr.mxu0 0.0
    %1149 = vmatpush1.msra.mxu0 0.0
    %1150 = vmatprep.subr.mxu0 0.0
    %1151 = vmatpush1.msra.mxu0 0.0
    %1152 = vmatprep.subr.mxu0 0.0
    %1153 = vmatpush1.msra.mxu0 0.0
    %1154 = vmatprep.subr.mxu0 0.0
    %1155 = vmatpush1.msra.mxu0 0.0
    %1156 = vmatprep.mubr.f32.mxu0 0.0
    %1157 = vmatmul.mubr.f32.gmra.mrb[0].mxu0 %v1090
    %v1158 = vpop.f32.mrb[0].mxu0
    %v1159 = vadd.f32 0.0, %v1158
    %v1160 = vpop.f32.mrb[0].mxu0
    %1161 = vdwg.mxu0
    %v1163 = vsel %vm408, %v1082, 0
    %1165 = vmatprep.subr.mxu0 0.0
    %1166 = vmatpush1.msra.mxu0 %v357
    %1167 = vmatprep.subr.mxu0 0.0
    %1168 = vmatpush1.msra.mxu0 0.0
    %1169 = vmatprep.subr.mxu0 0.0
    %1170 = vmatpush1.msra.mxu0 0.0
    %1171 = vmatprep.subr.mxu0 0.0
    %1172 = vmatpush1.msra.mxu0 0.0
    %1173 = vmatprep.subr.mxu0 0.0
    %1174 = vmatpush1.msra.mxu0 0.0
    %1175 = vmatprep.subr.mxu0 0.0
    %1176 = vmatpush1.msra.mxu0 0.0
    %1177 = vmatprep.subr.mxu0 0.0
    %1178 = vmatpush1.msra.mxu0 0.0
    %1179 = vmatprep.subr.mxu0 0.0
    %1180 = vmatpush1.msra.mxu0 0.0
    %1181 = vmatprep.subr.mxu0 0.0
    %1182 = vmatpush1.msra.mxu0 0.0
    %1183 = vmatprep.subr.mxu0 0.0
    %1184 = vmatpush1.msra.mxu0 0.0
    %1185 = vmatprep.subr.mxu0 0.0
    %1186 = vmatpush1.msra.mxu0 0.0
    %1187 = vmatprep.subr.mxu0 0.0
    %1188 = vmatpush1.msra.mxu0 0.0
    %1189 = vmatprep.subr.mxu0 0.0
    %1190 = vmatpush1.msra.mxu0 0.0
    %1191 = vmatprep.subr.mxu0 0.0
    %1192 = vmatpush1.msra.mxu0 0.0
    %1193 = vmatprep.subr.mxu0 0.0
    %1194 = vmatpush1.msra.mxu0 0.0
    %1195 = vmatprep.subr.mxu0 0.0
    %1196 = vmatpush1.msra.mxu0 0.0
    %1197 = vmatprep.subr.mxu0 0.0
    %1198 = vmatpush1.msra.mxu0 0.0
    %1199 = vmatprep.subr.mxu0 0.0
    %1200 = vmatpush1.msra.mxu0 0.0
    %1201 = vmatprep.subr.mxu0 0.0
    %1202 = vmatpush1.msra.mxu0 0.0
    %1203 = vmatprep.subr.mxu0 0.0
    %1204 = vmatpush1.msra.mxu0 0.0
    %1205 = vmatprep.subr.mxu0 0.0
    %1206 = vmatpush1.msra.mxu0 0.0
    %1207 = vmatprep.subr.mxu0 0.0
    %1208 = vmatpush1.msra.mxu0 0.0
    %1209 = vmatprep.subr.mxu0 0.0
    %1210 = vmatpush1.msra.mxu0 0.0
    %1211 = vmatprep.subr.mxu0 0.0
    %1212 = vmatpush1.msra.mxu0 0.0
    %1213 = vmatprep.subr.mxu0 0.0
    %1214 = vmatpush1.msra.mxu0 0.0
    %1215 = vmatprep.subr.mxu0 0.0
    %1216 = vmatpush1.msra.mxu0 0.0
    %1217 = vmatprep.subr.mxu0 0.0
    %1218 = vmatpush1.msra.mxu0 0.0
    %1219 = vmatprep.subr.mxu0 0.0
    %1220 = vmatpush1.msra.mxu0 0.0
    %1221 = vmatprep.subr.mxu0 0.0
    %1222 = vmatpush1.msra.mxu0 0.0
    %1223 = vmatprep.subr.mxu0 0.0
    %1224 = vmatpush1.msra.mxu0 0.0
    %1225 = vmatprep.subr.mxu0 0.0
    %1226 = vmatpush1.msra.mxu0 0.0
    %1227 = vmatprep.subr.mxu0 0.0
    %1228 = vmatpush1.msra.mxu0 0.0
    %1229 = vmatprep.mubr.f32.mxu0 0.0
    %1230 = vmatmul.mubr.f32.gmra.mrb[0].mxu0 %v1163
    %v1231 = vpop.f32.mrb[0].mxu0
    %v1232 = vadd.f32 0.0, %v1231
    %v1233 = vpop.f32.mrb[0].mxu0
    %1234 = vdwg.mxu0
    %v1236 = vsel %vm408, %v1083, 0
    %1238 = vmatprep.subr.mxu0 0.0
    %1239 = vmatpush1.msra.mxu0 %v391
    %1240 = vmatprep.subr.mxu0 0.0
    %1241 = vmatpush1.msra.mxu0 0.0
    %1242 = vmatprep.subr.mxu0 0.0
    %1243 = vmatpush1.msra.mxu0 0.0
    %1244 = vmatprep.subr.mxu0 0.0
    %1245 = vmatpush1.msra.mxu0 0.0
    %1246 = vmatprep.subr.mxu0 0.0
    %1247 = vmatpush1.msra.mxu0 0.0
    %1248 = vmatprep.subr.mxu0 0.0
    %1249 = vmatpush1.msra.mxu0 0.0
    %1250 = vmatprep.subr.mxu0 0.0
    %1251 = vmatpush1.msra.mxu0 0.0
    %1252 = vmatprep.subr.mxu0 0.0
    %1253 = vmatpush1.msra.mxu0 0.0
    %1254 = vmatprep.subr.mxu0 0.0
    %1255 = vmatpush1.msra.mxu0 0.0
    %1256 = vmatprep.subr.mxu0 0.0
    %1257 = vmatpush1.msra.mxu0 0.0
    %1258 = vmatprep.subr.mxu0 0.0
    %1259 = vmatpush1.msra.mxu0 0.0
    %1260 = vmatprep.subr.mxu0 0.0
    %1261 = vmatpush1.msra.mxu0 0.0
    %1262 = vmatprep.subr.mxu0 0.0
    %1263 = vmatpush1.msra.mxu0 0.0
    %1264 = vmatprep.subr.mxu0 0.0
    %1265 = vmatpush1.msra.mxu0 0.0
    %1266 = vmatprep.subr.mxu0 0.0
    %1267 = vmatpush1.msra.mxu0 0.0
    %1268 = vmatprep.subr.mxu0 0.0
    %1269 = vmatpush1.msra.mxu0 0.0
    %1270 = vmatprep.subr.mxu0 0.0
    %1271 = vmatpush1.msra.mxu0 0.0
    %1272 = vmatprep.subr.mxu0 0.0
    %1273 = vmatpush1.msra.mxu0 0.0
    %1274 = vmatprep.subr.mxu0 0.0
    %1275 = vmatpush1.msra.mxu0 0.0
    %1276 = vmatprep.subr.mxu0 0.0
    %1277 = vmatpush1.msra.mxu0 0.0
    %1278 = vmatprep.subr.mxu0 0.0
    %1279 = vmatpush1.msra.mxu0 0.0
    %1280 = vmatprep.subr.mxu0 0.0
    %1281 = vmatpush1.msra.mxu0 0.0
    %1282 = vmatprep.subr.mxu0 0.0
    %1283 = vmatpush1.msra.mxu0 0.0
    %1284 = vmatprep.subr.mxu0 0.0
    %1285 = vmatpush1.msra.mxu0 0.0
    %1286 = vmatprep.subr.mxu0 0.0
    %1287 = vmatpush1.msra.mxu0 0.0
    %1288 = vmatprep.subr.mxu0 0.0
    %1289 = vmatpush1.msra.mxu0 0.0
    %1290 = vmatprep.subr.mxu0 0.0
    %1291 = vmatpush1.msra.mxu0 0.0
    %1292 = vmatprep.subr.mxu0 0.0
    %1293 = vmatpush1.msra.mxu0 0.0
    %1294 = vmatprep.subr.mxu0 0.0
    %1295 = vmatpush1.msra.mxu0 0.0
    %1296 = vmatprep.subr.mxu0 0.0
    %1297 = vmatpush1.msra.mxu0 0.0
    %1298 = vmatprep.subr.mxu0 0.0
    %1299 = vmatpush1.msra.mxu0 0.0
    %1300 = vmatprep.subr.mxu0 0.0
    %1301 = vmatpush1.msra.mxu0 0.0
    %1302 = vmatprep.mubr.f32.mxu0 0.0
    %1303 = vmatmul.mubr.f32.gmra.mrb[0].mxu0 %v1236
    %v1304 = vpop.f32.mrb[0].mxu0
    %v1305 = vadd.f32 0.0, %v1304
    %v1306 = vpop.f32.mrb[0].mxu0
    %1307 = vdwg.mxu0
    %v1309 = vsel %vm408, %v1084, 0
    %1311 = vmatprep.subr.mxu0 0.0
    %1312 = vmatpush1.msra.mxu0 %v393
    %1313 = vmatprep.subr.mxu0 0.0
    %1314 = vmatpush1.msra.mxu0 0.0
    %1315 = vmatprep.subr.mxu0 0.0
    %1316 = vmatpush1.msra.mxu0 0.0
    %1317 = vmatprep.subr.mxu0 0.0
    %1318 = vmatpush1.msra.mxu0 0.0
    %1319 = vmatprep.subr.mxu0 0.0
    %1320 = vmatpush1.msra.mxu0 0.0
    %1321 = vmatprep.subr.mxu0 0.0
    %1322 = vmatpush1.msra.mxu0 0.0
    %1323 = vmatprep.subr.mxu0 0.0
    %1324 = vmatpush1.msra.mxu0 0.0
    %1325 = vmatprep.subr.mxu0 0.0
    %1326 = vmatpush1.msra.mxu0 0.0
    %1327 = vmatprep.subr.mxu0 0.0
    %1328 = vmatpush1.msra.mxu0 0.0
    %1329 = vmatprep.subr.mxu0 0.0
    %1330 = vmatpush1.msra.mxu0 0.0
    %1331 = vmatprep.subr.mxu0 0.0
    %1332 = vmatpush1.msra.mxu0 0.0
    %1333 = vmatprep.subr.mxu0 0.0
    %1334 = vmatpush1.msra.mxu0 0.0
    %1335 = vmatprep.subr.mxu0 0.0
    %1336 = vmatpush1.msra.mxu0 0.0
    %1337 = vmatprep.subr.mxu0 0.0
    %1338 = vmatpush1.msra.mxu0 0.0
    %1339 = vmatprep.subr.mxu0 0.0
    %1340 = vmatpush1.msra.mxu0 0.0
    %1341 = vmatprep.subr.mxu0 0.0
    %1342 = vmatpush1.msra.mxu0 0.0
    %1343 = vmatprep.subr.mxu0 0.0
    %1344 = vmatpush1.msra.mxu0 0.0
    %1345 = vmatprep.subr.mxu0 0.0
    %1346 = vmatpush1.msra.mxu0 0.0
    %1347 = vmatprep.subr.mxu0 0.0
    %1348 = vmatpush1.msra.mxu0 0.0
    %1349 = vmatprep.subr.mxu0 0.0
    %1350 = vmatpush1.msra.mxu0 0.0
    %1351 = vmatprep.subr.mxu0 0.0
    %1352 = vmatpush1.msra.mxu0 0.0
    %1353 = vmatprep.subr.mxu0 0.0
    %1354 = vmatpush1.msra.mxu0 0.0
    %1355 = vmatprep.subr.mxu0 0.0
    %1356 = vmatpush1.msra.mxu0 0.0
    %1357 = vmatprep.subr.mxu0 0.0
    %1358 = vmatpush1.msra.mxu0 0.0
    %1359 = vmatprep.subr.mxu0 0.0
    %1360 = vmatpush1.msra.mxu0 0.0
    %1361 = vmatprep.subr.mxu0 0.0
    %1362 = vmatpush1.msra.mxu0 0.0
    %1363 = vmatprep.subr.mxu0 0.0
    %1364 = vmatpush1.msra.mxu0 0.0
    %1365 = vmatprep.subr.mxu0 0.0
    %1366 = vmatpush1.msra.mxu0 0.0
    %1367 = vmatprep.subr.mxu0 0.0
    %1368 = vmatpush1.msra.mxu0 0.0
    %1369 = vmatprep.subr.mxu0 0.0
    %1370 = vmatpush1.msra.mxu0 0.0
    %1371 = vmatprep.subr.mxu0 0.0
    %1372 = vmatpush1.msra.mxu0 0.0
    %1373 = vmatprep.subr.mxu0 0.0
    %1374 = vmatpush1.msra.mxu0 0.0
    %1375 = vmatprep.mubr.f32.mxu0 0.0
    %1376 = vmatmul.mubr.f32.gmra.mrb[0].mxu0 %v1309
    %v1377 = vpop.f32.mrb[0].mxu0
    %v1378 = vadd.f32 0.0, %v1377
    %v1379 = vpop.f32.mrb[0].mxu0
    %1380 = vdwg.mxu0
    %v1382 = vsel %vm408, %v1085, 0
    %1384 = vmatprep.subr.mxu0 0.0
    %1385 = vmatpush1.msra.mxu0 %v397
    %1386 = vmatprep.subr.mxu0 0.0
    %1387 = vmatpush1.msra.mxu0 0.0
    %1388 = vmatprep.subr.mxu0 0.0
    %1389 = vmatpush1.msra.mxu0 0.0
    %1390 = vmatprep.subr.mxu0 0.0
    %1391 = vmatpush1.msra.mxu0 0.0
    %1392 = vmatprep.subr.mxu0 0.0
    %1393 = vmatpush1.msra.mxu0 0.0
    %1394 = vmatprep.subr.mxu0 0.0
    %1395 = vmatpush1.msra.mxu0 0.0
    %1396 = vmatprep.subr.mxu0 0.0
    %1397 = vmatpush1.msra.mxu0 0.0
    %1398 = vmatprep.subr.mxu0 0.0
    %1399 = vmatpush1.msra.mxu0 0.0
    %1400 = vmatprep.subr.mxu0 0.0
    %1401 = vmatpush1.msra.mxu0 0.0
    %1402 = vmatprep.subr.mxu0 0.0
    %1403 = vmatpush1.msra.mxu0 0.0
    %1404 = vmatprep.subr.mxu0 0.0
    %1405 = vmatpush1.msra.mxu0 0.0
    %1406 = vmatprep.subr.mxu0 0.0
    %1407 = vmatpush1.msra.mxu0 0.0
    %1408 = vmatprep.subr.mxu0 0.0
    %1409 = vmatpush1.msra.mxu0 0.0
    %1410 = vmatprep.subr.mxu0 0.0
    %1411 = vmatpush1.msra.mxu0 0.0
    %1412 = vmatprep.subr.mxu0 0.0
    %1413 = vmatpush1.msra.mxu0 0.0
    %1414 = vmatprep.subr.mxu0 0.0
    %1415 = vmatpush1.msra.mxu0 0.0
    %1416 = vmatprep.subr.mxu0 0.0
    %1417 = vmatpush1.msra.mxu0 0.0
    %1418 = vmatprep.subr.mxu0 0.0
    %1419 = vmatpush1.msra.mxu0 0.0
    %1420 = vmatprep.subr.mxu0 0.0
    %1421 = vmatpush1.msra.mxu0 0.0
    %1422 = vmatprep.subr.mxu0 0.0
    %1423 = vmatpush1.msra.mxu0 0.0
    %1424 = vmatprep.subr.mxu0 0.0
    %1425 = vmatpush1.msra.mxu0 0.0
    %1426 = vmatprep.subr.mxu0 0.0
    %1427 = vmatpush1.msra.mxu0 0.0
    %1428 = vmatprep.subr.mxu0 0.0
    %1429 = vmatpush1.msra.mxu0 0.0
    %1430 = vmatprep.subr.mxu0 0.0
    %1431 = vmatpush1.msra.mxu0 0.0
    %1432 = vmatprep.subr.mxu0 0.0
    %1433 = vmatpush1.msra.mxu0 0.0
    %1434 = vmatprep.subr.mxu0 0.0
    %1435 = vmatpush1.msra.mxu0 0.0
    %1436 = vmatprep.subr.mxu0 0.0
    %1437 = vmatpush1.msra.mxu0 0.0
    %1438 = vmatprep.subr.mxu0 0.0
    %1439 = vmatpush1.msra.mxu0 0.0
    %1440 = vmatprep.subr.mxu0 0.0
    %1441 = vmatpush1.msra.mxu0 0.0
    %1442 = vmatprep.subr.mxu0 0.0
    %1443 = vmatpush1.msra.mxu0 0.0
    %1444 = vmatprep.subr.mxu0 0.0
    %1445 = vmatpush1.msra.mxu0 0.0
    %1446 = vmatprep.subr.mxu0 0.0
    %1447 = vmatpush1.msra.mxu0 0.0
    %1448 = vmatprep.mubr.f32.mxu0 0.0
    %1449 = vmatmul.mubr.f32.gmra.mrb[0].mxu0 %v1382
    %v1450 = vpop.f32.mrb[0].mxu0
    %v1451 = vadd.f32 0.0, %v1450
    %v1452 = vpop.f32.mrb[0].mxu0
    %1453 = vdwg.mxu0
    %v1455 = vsel %vm408, %v1086, 0
    %1457 = vmatprep.subr.mxu0 0.0
    %1458 = vmatpush1.msra.mxu0 %v399
    %1459 = vmatprep.subr.mxu0 0.0
    %1460 = vmatpush1.msra.mxu0 0.0
    %1461 = vmatprep.subr.mxu0 0.0
    %1462 = vmatpush1.msra.mxu0 0.0
    %1463 = vmatprep.subr.mxu0 0.0
    %1464 = vmatpush1.msra.mxu0 0.0
    %1465 = vmatprep.subr.mxu0 0.0
    %1466 = vmatpush1.msra.mxu0 0.0
    %1467 = vmatprep.subr.mxu0 0.0
    %1468 = vmatpush1.msra.mxu0 0.0
    %1469 = vmatprep.subr.mxu0 0.0
    %1470 = vmatpush1.msra.mxu0 0.0
    %1471 = vmatprep.subr.mxu0 0.0
    %1472 = vmatpush1.msra.mxu0 0.0
    %1473 = vmatprep.subr.mxu0 0.0
    %1474 = vmatpush1.msra.mxu0 0.0
    %1475 = vmatprep.subr.mxu0 0.0
    %1476 = vmatpush1.msra.mxu0 0.0
    %1477 = vmatprep.subr.mxu0 0.0
    %1478 = vmatpush1.msra.mxu0 0.0
    %1479 = vmatprep.subr.mxu0 0.0
    %1480 = vmatpush1.msra.mxu0 0.0
    %1481 = vmatprep.subr.mxu0 0.0
    %1482 = vmatpush1.msra.mxu0 0.0
    %1483 = vmatprep.subr.mxu0 0.0
    %1484 = vmatpush1.msra.mxu0 0.0
    %1485 = vmatprep.subr.mxu0 0.0
    %1486 = vmatpush1.msra.mxu0 0.0
    %1487 = vmatprep.subr.mxu0 0.0
    %1488 = vmatpush1.msra.mxu0 0.0
    %1489 = vmatprep.subr.mxu0 0.0
    %1490 = vmatpush1.msra.mxu0 0.0
    %1491 = vmatprep.subr.mxu0 0.0
    %1492 = vmatpush1.msra.mxu0 0.0
    %1493 = vmatprep.subr.mxu0 0.0
    %1494 = vmatpush1.msra.mxu0 0.0
    %1495 = vmatprep.subr.mxu0 0.0
    %1496 = vmatpush1.msra.mxu0 0.0
    %1497 = vmatprep.subr.mxu0 0.0
    %1498 = vmatpush1.msra.mxu0 0.0
    %1499 = vmatprep.subr.mxu0 0.0
    %1500 = vmatpush1.msra.mxu0 0.0
    %1501 = vmatprep.subr.mxu0 0.0
    %1502 = vmatpush1.msra.mxu0 0.0
    %1503 = vmatprep.subr.mxu0 0.0
    %1504 = vmatpush1.msra.mxu0 0.0
    %1505 = vmatprep.subr.mxu0 0.0
    %1506 = vmatpush1.msra.mxu0 0.0
    %1507 = vmatprep.subr.mxu0 0.0
    %1508 = vmatpush1.msra.mxu0 0.0
    %1509 = vmatprep.subr.mxu0 0.0
    %1510 = vmatpush1.msra.mxu0 0.0
    %1511 = vmatprep.subr.mxu0 0.0
    %1512 = vmatpush1.msra.mxu0 0.0
    %1513 = vmatprep.subr.mxu0 0.0
    %1514 = vmatpush1.msra.mxu0 0.0
    %1515 = vmatprep.subr.mxu0 0.0
    %1516 = vmatpush1.msra.mxu0 0.0
    %1517 = vmatprep.subr.mxu0 0.0
    %1518 = vmatpush1.msra.mxu0 0.0
    %1519 = vmatprep.subr.mxu0 0.0
    %1520 = vmatpush1.msra.mxu0 0.0
    %1521 = vmatprep.mubr.f32.mxu0 0.0
    %1522 = vmatmul.mubr.f32.gmra.mrb[0].mxu0 %v1455
    %v1523 = vpop.f32.mrb[0].mxu0
    %v1524 = vadd.f32 0.0, %v1523
    %v1525 = vpop.f32.mrb[0].mxu0
    %1526 = vdwg.mxu0
    %v1528 = vsel %vm408, %v1087, 0
    %1530 = vmatprep.subr.mxu0 0.0
    %1531 = vmatpush1.msra.mxu0 %v403
    %1532 = vmatprep.subr.mxu0 0.0
    %1533 = vmatpush1.msra.mxu0 0.0
    %1534 = vmatprep.subr.mxu0 0.0
    %1535 = vmatpush1.msra.mxu0 0.0
    %1536 = vmatprep.subr.mxu0 0.0
    %1537 = vmatpush1.msra.mxu0 0.0
    %1538 = vmatprep.subr.mxu0 0.0
    %1539 = vmatpush1.msra.mxu0 0.0
    %1540 = vmatprep.subr.mxu0 0.0
    %1541 = vmatpush1.msra.mxu0 0.0
    %1542 = vmatprep.subr.mxu0 0.0
    %1543 = vmatpush1.msra.mxu0 0.0
    %1544 = vmatprep.subr.mxu0 0.0
    %1545 = vmatpush1.msra.mxu0 0.0
    %1546 = vmatprep.subr.mxu0 0.0
    %1547 = vmatpush1.msra.mxu0 0.0
    %1548 = vmatprep.subr.mxu0 0.0
    %1549 = vmatpush1.msra.mxu0 0.0
    %1550 = vmatprep.subr.mxu0 0.0
    %1551 = vmatpush1.msra.mxu0 0.0
    %1552 = vmatprep.subr.mxu0 0.0
    %1553 = vmatpush1.msra.mxu0 0.0
    %1554 = vmatprep.subr.mxu0 0.0
    %1555 = vmatpush1.msra.mxu0 0.0
    %1556 = vmatprep.subr.mxu0 0.0
    %1557 = vmatpush1.msra.mxu0 0.0
    %1558 = vmatprep.subr.mxu0 0.0
    %1559 = vmatpush1.msra.mxu0 0.0
    %1560 = vmatprep.subr.mxu0 0.0
    %1561 = vmatpush1.msra.mxu0 0.0
    %1562 = vmatprep.subr.mxu0 0.0
    %1563 = vmatpush1.msra.mxu0 0.0
    %1564 = vmatprep.subr.mxu0 0.0
    %1565 = vmatpush1.msra.mxu0 0.0
    %1566 = vmatprep.subr.mxu0 0.0
    %1567 = vmatpush1.msra.mxu0 0.0
    %1568 = vmatprep.subr.mxu0 0.0
    %1569 = vmatpush1.msra.mxu0 0.0
    %1570 = vmatprep.subr.mxu0 0.0
    %1571 = vmatpush1.msra.mxu0 0.0
    %1572 = vmatprep.subr.mxu0 0.0
    %1573 = vmatpush1.msra.mxu0 0.0
    %1574 = vmatprep.subr.mxu0 0.0
    %1575 = vmatpush1.msra.mxu0 0.0
    %1576 = vmatprep.subr.mxu0 0.0
    %1577 = vmatpush1.msra.mxu0 0.0
    %1578 = vmatprep.subr.mxu0 0.0
    %1579 = vmatpush1.msra.mxu0 0.0
    %1580 = vmatprep.subr.mxu0 0.0
    %1581 = vmatpush1.msra.mxu0 0.0
    %1582 = vmatprep.subr.mxu0 0.0
    %1583 = vmatpush1.msra.mxu0 0.0
    %1584 = vmatprep.subr.mxu0 0.0
    %1585 = vmatpush1.msra.mxu0 0.0
    %1586 = vmatprep.subr.mxu0 0.0
    %1587 = vmatpush1.msra.mxu0 0.0
    %1588 = vmatprep.subr.mxu0 0.0
    %1589 = vmatpush1.msra.mxu0 0.0
    %1590 = vmatprep.subr.mxu0 0.0
    %1591 = vmatpush1.msra.mxu0 0.0
    %1592 = vmatprep.subr.mxu0 0.0
    %1593 = vmatpush1.msra.mxu0 0.0
    %1594 = vmatprep.mubr.f32.mxu0 0.0
    %1595 = vmatmul.mubr.f32.gmra.mrb[0].mxu0 %v1528
    %v1596 = vpop.f32.mrb[0].mxu0
    %v1597 = vadd.f32 0.0, %v1596
    %v1598 = vpop.f32.mrb[0].mxu0
    %1599 = vdwg.mxu0
    %v1601 = vsel %vm408, %v1088, 0
    %1603 = vmatprep.subr.mxu0 0.0
    %1604 = vmatpush1.msra.mxu0 %v405
    %1605 = vmatprep.subr.mxu0 0.0
    %1606 = vmatpush1.msra.mxu0 0.0
    %1607 = vmatprep.subr.mxu0 0.0
    %1608 = vmatpush1.msra.mxu0 0.0
    %1609 = vmatprep.subr.mxu0 0.0
    %1610 = vmatpush1.msra.mxu0 0.0
    %1611 = vmatprep.subr.mxu0 0.0
    %1612 = vmatpush1.msra.mxu0 0.0
    %1613 = vmatprep.subr.mxu0 0.0
    %1614 = vmatpush1.msra.mxu0 0.0
    %1615 = vmatprep.subr.mxu0 0.0
    %1616 = vmatpush1.msra.mxu0 0.0
    %1617 = vmatprep.subr.mxu0 0.0
    %1618 = vmatpush1.msra.mxu0 0.0
    %1619 = vmatprep.subr.mxu0 0.0
    %1620 = vmatpush1.msra.mxu0 0.0
    %1621 = vmatprep.subr.mxu0 0.0
    %1622 = vmatpush1.msra.mxu0 0.0
    %1623 = vmatprep.subr.mxu0 0.0
    %1624 = vmatpush1.msra.mxu0 0.0
    %1625 = vmatprep.subr.mxu0 0.0
    %1626 = vmatpush1.msra.mxu0 0.0
    %1627 = vmatprep.subr.mxu0 0.0
    %1628 = vmatpush1.msra.mxu0 0.0
    %1629 = vmatprep.subr.mxu0 0.0
    %1630 = vmatpush1.msra.mxu0 0.0
    %1631 = vmatprep.subr.mxu0 0.0
    %1632 = vmatpush1.msra.mxu0 0.0
    %1633 = vmatprep.subr.mxu0 0.0
    %1634 = vmatpush1.msra.mxu0 0.0
    %1635 = vmatprep.subr.mxu0 0.0
    %1636 = vmatpush1.msra.mxu0 0.0
    %1637 = vmatprep.subr.mxu0 0.0
    %1638 = vmatpush1.msra.mxu0 0.0
    %1639 = vmatprep.subr.mxu0 0.0
    %1640 = vmatpush1.msra.mxu0 0.0
    %1641 = vmatprep.subr.mxu0 0.0
    %1642 = vmatpush1.msra.mxu0 0.0
    %1643 = vmatprep.subr.mxu0 0.0
    %1644 = vmatpush1.msra.mxu0 0.0
    %1645 = vmatprep.subr.mxu0 0.0
    %1646 = vmatpush1.msra.mxu0 0.0
    %1647 = vmatprep.subr.mxu0 0.0
    %1648 = vmatpush1.msra.mxu0 0.0
    %1649 = vmatprep.subr.mxu0 0.0
    %1650 = vmatpush1.msra.mxu0 0.0
    %1651 = vmatprep.subr.mxu0 0.0
    %1652 = vmatpush1.msra.mxu0 0.0
    %1653 = vmatprep.subr.mxu0 0.0
    %1654 = vmatpush1.msra.mxu0 0.0
    %1655 = vmatprep.subr.mxu0 0.0
    %1656 = vmatpush1.msra.mxu0 0.0
    %1657 = vmatprep.subr.mxu0 0.0
    %1658 = vmatpush1.msra.mxu0 0.0
    %1659 = vmatprep.subr.mxu0 0.0
    %1660 = vmatpush1.msra.mxu0 0.0
    %1661 = vmatprep.subr.mxu0 0.0
    %1662 = vmatpush1.msra.mxu0 0.0
    %1663 = vmatprep.subr.mxu0 0.0
    %1664 = vmatpush1.msra.mxu0 0.0
    %1665 = vmatprep.subr.mxu0 0.0
    %1666 = vmatpush1.msra.mxu0 0.0
    %1667 = vmatprep.mubr.f32.mxu0 0.0
    %1668 = vmatmul.mubr.f32.gmra.mrb[0].mxu0 %v1601
    %v1669 = vpop.f32.mrb[0].mxu0
    %v1670 = vadd.f32 0.0, %v1669
    %v1671 = vpop.f32.mrb[0].mxu0
    %1672 = vdwg.mxu0
    %1675 = vrot.lane.b32.xlu0 %v1305, 8
    %v1676 = vpop.permute.xlu0 %1675
    %1677 = vrot.lane.b32.xlu0 %v1378, 8
    %v1678 = vpop.permute.xlu0 %1677
    %1683 = vrot.lane.b32.xlu0 %v1451, 16
    %v1684 = vpop.permute.xlu0 %1683
    %1685 = vrot.lane.b32.xlu0 %v1524, 16
    %v1686 = vpop.permute.xlu0 %1685
    %1691 = vrot.lane.b32.xlu0 %v1597, 24
    %v1692 = vpop.permute.xlu0 %1691
    %1693 = vrot.lane.b32.xlu0 %v1670, 24
    %v1694 = vpop.permute.xlu0 %1693
    %v1697 = vsel %vm408, %v1159, %v1676
    %v1698 = vsel %vm408, %v1232, %v1678
    %vm1699 = vcmask 130048
    %v1700 = vsel %vm1699, %v1697, %v1684
    %v1701 = vsel %vm1699, %v1698, %v1686
    %vm1702 = vcmask 195584
    %v1703 = vsel %vm1702, %v1700, %v1692
    %v1704 = vsel %vm1702, %v1701, %v1694
    %v1705 = vld [vmem:[#allocation11] sm:$0xff]
    %v1706 = vld [vmem:[#allocation11 + $0x8] sm:$0xff]
    %v1707 = vld [vmem:[#allocation11 + $0x10] sm:$0xff]
    %v1708 = vld [vmem:[#allocation11 + $0x18] sm:$0xff]
    %v1710 = vsel %vm114, %v1703, 0
    %v1713 = vsel %vm114, %v1704, 0
    %1715 = vmatprep.subr.mxu0 0.0
    %1716 = vmatpush1.msra.mxu0 %v1705
    %1717 = vmatprep.subr.mxu0 0.0
    %1718 = vmatpush1.msra.mxu0 %v1706
    %1719 = vmatprep.subr.mxu0 0.0
    %1720 = vmatpush1.msra.mxu0 %v1707
    %1721 = vmatprep.subr.mxu0 0.0
    %1722 = vmatpush1.msra.mxu0 %v1708
    %1723 = vmatprep.subr.mxu0 0.0
    %1724 = vmatpush1.msra.mxu0 0.0
    %1725 = vmatprep.subr.mxu0 0.0
    %1726 = vmatpush1.msra.mxu0 0.0
    %1727 = vmatprep.subr.mxu0 0.0
    %1728 = vmatpush1.msra.mxu0 0.0
    %1729 = vmatprep.subr.mxu0 0.0
    %1730 = vmatpush1.msra.mxu0 0.0
    %1731 = vmatprep.subr.mxu0 0.0
    %1732 = vmatpush1.msra.mxu0 0.0
    %1733 = vmatprep.subr.mxu0 0.0
    %1734 = vmatpush1.msra.mxu0 0.0
    %1735 = vmatprep.subr.mxu0 0.0
    %1736 = vmatpush1.msra.mxu0 0.0
    %1737 = vmatprep.subr.mxu0 0.0
    %1738 = vmatpush1.msra.mxu0 0.0
    %1739 = vmatprep.subr.mxu0 0.0
    %1740 = vmatpush1.msra.mxu0 0.0
    %1741 = vmatprep.subr.mxu0 0.0
    %1742 = vmatpush1.msra.mxu0 0.0
    %1743 = vmatprep.subr.mxu0 0.0
    %1744 = vmatpush1.msra.mxu0 0.0
    %1745 = vmatprep.subr.mxu0 0.0
    %1746 = vmatpush1.msra.mxu0 0.0
    %1747 = vmatprep.subr.mxu0 0.0
    %1748 = vmatpush1.msra.mxu0 0.0
    %1749 = vmatprep.subr.mxu0 0.0
    %1750 = vmatpush1.msra.mxu0 0.0
    %1751 = vmatprep.subr.mxu0 0.0
    %1752 = vmatpush1.msra.mxu0 0.0
    %1753 = vmatprep.subr.mxu0 0.0
    %1754 = vmatpush1.msra.mxu0 0.0
    %1755 = vmatprep.subr.mxu0 0.0
    %1756 = vmatpush1.msra.mxu0 0.0
    %1757 = vmatprep.subr.mxu0 0.0
    %1758 = vmatpush1.msra.mxu0 0.0
    %1759 = vmatprep.subr.mxu0 0.0
    %1760 = vmatpush1.msra.mxu0 0.0
    %1761 = vmatprep.subr.mxu0 0.0
    %1762 = vmatpush1.msra.mxu0 0.0
    %1763 = vmatprep.subr.mxu0 0.0
    %1764 = vmatpush1.msra.mxu0 0.0
    %1765 = vmatprep.subr.mxu0 0.0
    %1766 = vmatpush1.msra.mxu0 0.0
    %1767 = vmatprep.subr.mxu0 0.0
    %1768 = vmatpush1.msra.mxu0 0.0
    %1769 = vmatprep.subr.mxu0 0.0
    %1770 = vmatpush1.msra.mxu0 0.0
    %1771 = vmatprep.subr.mxu0 0.0
    %1772 = vmatpush1.msra.mxu0 0.0
    %1773 = vmatprep.subr.mxu0 0.0
    %1774 = vmatpush1.msra.mxu0 0.0
    %1775 = vmatprep.subr.mxu0 0.0
    %1776 = vmatpush1.msra.mxu0 0.0
    %1777 = vmatprep.subr.mxu0 0.0
    %1778 = vmatpush1.msra.mxu0 0.0
    %1779 = vmatprep.mubr.f32.mxu0 0.0
    %1780 = vmatmul.mubr.f32.gmra.mrb[0].mxu0 %v1710
    %v1781 = vpop.f32.mrb[0].mxu0
    %v1782 = vadd.f32 0.0, %v1781
    %v1783 = vpop.f32.mrb[0].mxu0
    %1784 = vmatprep.mubr.f32.mxu0 0.0
    %1785 = vmatmul.mubr.f32.gmra.mrb[0].mxu0 %v1713
    %v1786 = vpop.f32.mrb[0].mxu0
    %v1787 = vadd.f32 0.0, %v1786
    %v1788 = vpop.f32.mrb[0].mxu0
    %1789 = vdwg.mxu0
    %1790 = vst.msk [vmem:[#allocation13] sm:$0xff] %vm114, %v1782
    %1791 = vst.msk [vmem:[#allocation13 + $0x8] sm:$0xff] %vm114, %v1787
    // Predicated region
    $region50: #{tpu_custom_call.1} parent=1 // pred_check
      _
    $region51: #{tpu_custom_call.1} parent=1 // pred_check_branch
      %1793 = sbr.rel (0) target = $region53
    $region52: #{tpu_custom_call.1} parent=1 // pred_region
      %s1795 = ssub.s32 256, 256
      %1796 = vsyncadd [#allocation4], %s1795
      %s1797 = sshll.u32 [#allocation13], 4
      %s1798 = int_to_ptr.vmem [resolvable:$true] %s1797
      %1803 = dma.vmem_to_hbm [thread:$0]  %s1798, 256, %s6, [#allocation4], 128, 128, 8
    $region53: #{tpu_custom_call.1} parent=1 // pred_fallthru
      _
    // Predicated region
    $region54: #{tpu_custom_call.1} parent=1 // pred_check
      _
    $region55: #{tpu_custom_call.1} parent=1 // pred_check_branch
      %1805 = sbr.rel (0) target = $region57
    $region56: #{tpu_custom_call.1} parent=1 // pred_region
      %1806 = dma.done [#allocation4], 256
    $region57: #{tpu_custom_call.1} parent=1 // pred_fallthru
      _
    %1807 = vsyncpa [#allocation3], 1
    %1808 = vsyncpa [#allocation6], 1
    %1809 = vsyncpa [#allocation9], 1
    %1810 = vsyncpa [#allocation12], 1
    %1811 = vsyncpa [#allocation4], 1

</llo_original>
